<compile_context>
chip_gen: v7x
topology: tpu7x:2x2x1
jax: 0.10.0
libtpu: 0.0.40
codegen_flags: <defaults>
</compile_context>

<pallas_src>
import functools

import jax
import jax.numpy as jnp
from jax.experimental import pallas as pl
from jax.experimental.pallas import tpu as pltpu

F32 = jnp.float32
BF16 = jnp.bfloat16
OUT_PAD = 128  # classifier logits padded to a lane-dense 128-wide slab

# Row indices inside the packed 128-wide vector slab.
(R_GAT1_B, R_BN1_S, R_BN1_T, R_GAT2_B, R_BN2_S, R_BN2_T, R_PROJ_B,
 R_EMB_MASK, R_EMB_NODE, R_FUS_B2, R_FUS_LN2_G, R_FUS_LN2_B,
 R_CLS_B1, R_CLS_B2) = range(14)
N_ROWS_128 = 16
# Row indices inside the packed 512-wide vector slab.
R_FUS_B1, R_FUS_LN1_G, R_FUS_LN1_B = range(3)
N_ROWS_512 = 8


# --------------------------------------------------------------------------
# Fully fused forward kernel (single invocation, everything VMEM-resident).
# --------------------------------------------------------------------------
def _gmlm_kernel(x_ref, adj_ref, mask_ref,
                 g1w_ref, g1a_ref, g2w_ref, g2a_ref,
                 pw_ref, f1w_ref, f2w_ref, c1w_ref, c2w_ref,
                 v128_ref, v512_ref, out_ref):
    n = x_ref.shape[0]
    c1 = g1w_ref.shape[1]       # heads1 * hidden
    c2 = g2w_ref.shape[1]       # heads2 * hidden
    bert = pw_ref.shape[1]      # bert_hidden
    fusion = f1w_ref.shape[1]   # fusion_hidden
    hid = c1w_ref.shape[1]      # hidden

    def vec(ref, row, width):
        # Static row/width slice out of a packed bias/scale slab -> [1, width].
        return ref[row:row + 1, :width]

    # Additive edge mask built ONCE from the int8 adjacency (adj[i,j]!=0 means
    # edge j->i incl. self-loops); shared by both GAT layers.
    neg = jnp.where(adj_ref[...].astype(F32) > 0.0, 0.0, -1e30)        # [N, N]

    def gat(h_in, w_ref, a_ref, bias):
        heads = a_ref.shape[1] // 2
        fpp = w_ref.shape[1] // heads                                  # feat per head
        # Node projection (bf16 operands, f32 accumulate).
        hp = jnp.dot(h_in.astype(BF16), w_ref[...],
                     preferred_element_type=F32)                       # [N, H*F]
        hp_bf = hp.astype(BF16)                                        # reused below
        # All per-head src/dst scores in one matmul (block-structured A, bf16).
        scores = jnp.dot(hp_bf, a_ref[...],
                         preferred_element_type=F32)                   # [N, 2H]
        scores_t = scores.T                                            # [2H, N] one XLU transpose
        # Stack heads along sublanes: e[h*N+i, j] = dst_h[i] + src_h[j].
        dst_col = jnp.concatenate(
            [scores[:, heads + h:heads + h + 1] for h in range(heads)],
            axis=0)                                                    # [H*N, 1]
        src_rows = jnp.concatenate(
            [jnp.broadcast_to(scores_t[h:h + 1, :], (n, n)) for h in range(heads)],
            axis=0)                                                    # [H*N, N]
        neg_rep = jnp.concatenate([neg] * heads, axis=0)               # [H*N, N]
        e = dst_col + src_rows
        e = jnp.maximum(e, 0.2 * e)                                    # LeakyReLU(0.2)
        e = e + neg_rep
        # Batched softmax over source nodes (one pass for all heads).
        m = jnp.max(e, axis=1, keepdims=True)
        p = jnp.exp(e - m)                                             # masked -> underflow to 0
        denom = jnp.sum(p, axis=1, keepdims=True)
        alpha = p * pl.reciprocal(denom, approx=True)                  # [H*N, N]
        # One MXU matmul for all heads; keep the block-diagonal output slices.
        full = jnp.dot(alpha.astype(BF16), hp_bf,
                       preferred_element_type=F32)                     # [H*N, H*F]
        out = jnp.concatenate(
            [full[h * n:(h + 1) * n, h * fpp:(h + 1) * fpp] for h in range(heads)],
            axis=1)                                                    # [N, H*F]
        return out + bias

    def bn_elu(h, s, t):
        y = h * s + t                                                  # folded eval BN
        # ELU(alpha=1); exp on the clamped value avoids inf in the untaken branch.
        return jnp.where(y > 0, y, jnp.exp(jnp.minimum(y, 0.0)) - 1.0)

    def layer_norm(h, g, b):
        mu = jnp.mean(h, axis=-1, keepdims=True)
        var = jnp.mean(jnp.square(h - mu), axis=-1, keepdims=True)
        return (h - mu) * jax.lax.rsqrt(var + 1e-5) * g + b

    # ---- graph branch ------------------------------------------------------
    h = gat(x_ref[...], g1w_ref, g1a_ref, vec(v128_ref, R_GAT1_B, c1))
    h = bn_elu(h, vec(v128_ref, R_BN1_S, c1), vec(v128_ref, R_BN1_T, c1))  # dropout1 = id
    h = gat(h, g2w_ref, g2a_ref, vec(v128_ref, R_GAT2_B, c2))
    h = bn_elu(h, vec(v128_ref, R_BN2_S, c2), vec(v128_ref, R_BN2_T, c2))  # dropout2 = id
    x_graph = (jnp.dot(h.astype(BF16), pw_ref[...], preferred_element_type=F32)
               + vec(v128_ref, R_PROJ_B, bert))                        # [N, bert]

    # ---- text branch: per-flag CLS embedding selected in-kernel ------------
    mflag = mask_ref[...]                                              # [N, 1] in {0,1}
    bert_emb = (mflag * vec(v128_ref, R_EMB_MASK, bert)
                + (1.0 - mflag) * vec(v128_ref, R_EMB_NODE, bert))     # [N, bert]

    # ---- fusion (lane-concat, single matmul) + classifier -------------------
    combined = jnp.concatenate([x_graph, bert_emb], axis=1).astype(BF16)  # [N, 2*bert]
    h1 = (jnp.dot(combined, f1w_ref[...], preferred_element_type=F32)
          + vec(v512_ref, R_FUS_B1, fusion))
    h1 = layer_norm(h1, vec(v512_ref, R_FUS_LN1_G, fusion),
                    vec(v512_ref, R_FUS_LN1_B, fusion))
    h1 = jnp.maximum(h1, 0.0)                                          # ReLU, dropout = id
    h2 = (jnp.dot(h1.astype(BF16), f2w_ref[...], preferred_element_type=F32)
          + vec(v128_ref, R_FUS_B2, bert))
    h2 = layer_norm(h2, vec(v128_ref, R_FUS_LN2_G, bert),
                    vec(v128_ref, R_FUS_LN2_B, bert))
    z = (jnp.dot(h2.astype(BF16), c1w_ref[...], preferred_element_type=F32)
         + vec(v128_ref, R_CLS_B1, hid))
    z = jnp.maximum(z, 0.0)                                            # ReLU, dropout = id
    # Final logits as one unmasked 128-lane store.
    out_ref[...] = (jnp.dot(z.astype(BF16), c2w_ref[...], preferred_element_type=F32)
                    + vec(v128_ref, R_CLS_B2, OUT_PAD))


# --------------------------------------------------------------------------
# Parameter init (deterministic, synthetic) — raw (torch-like) layout.
# --------------------------------------------------------------------------
def init_params(key, *, in_channels, hidden, nhead, bert_hidden,
                fusion_hidden, num_classes):
    ks = iter(jax.random.split(key, 32))

    def rnd(shape, scale=0.1):
        return (scale * jax.random.normal(next(ks), shape)).astype(F32)

    p = {}
    # GAT layer 1: in -> hidden, heads=nhead, concat
    p["gat1_w"] = rnd((in_channels, nhead * hidden))
    p["gat1_asrc"] = rnd((nhead, hidden))
    p["gat1_adst"] = rnd((nhead, hidden))
    p["gat1_b"] = rnd((1, nhead * hidden))
    c1 = nhead * hidden
    p["bn1_g"] = rnd((1, c1), 1.0) + 1.0
    p["bn1_b"] = rnd((1, c1))
    p["bn1_mean"] = jnp.zeros((1, c1), F32)
    p["bn1_var"] = jnp.ones((1, c1), F32)
    # GAT layer 2: nhead*hidden -> hidden, heads=2, concat
    p["gat2_w"] = rnd((c1, 2 * hidden))
    p["gat2_asrc"] = rnd((2, hidden))
    p["gat2_adst"] = rnd((2, hidden))
    p["gat2_b"] = rnd((1, 2 * hidden))
    c2 = 2 * hidden
    p["bn2_g"] = rnd((1, c2), 1.0) + 1.0
    p["bn2_b"] = rnd((1, c2))
    p["bn2_mean"] = jnp.zeros((1, c2), F32)
    p["bn2_var"] = jnp.ones((1, c2), F32)
    # proj: 2*hidden -> bert_hidden
    p["proj_w"] = rnd((c2, bert_hidden))
    p["proj_b"] = rnd((1, bert_hidden))
    # synthetic "BERT CLS" embeddings (one per mask-flag value)
    p["emb_mask"] = rnd((1, bert_hidden), 1.0)
    p["emb_node"] = rnd((1, bert_hidden), 1.0)
    # fusion network
    p["fus_w1"] = rnd((2 * bert_hidden, fusion_hidden))
    p["fus_b1"] = rnd((1, fusion_hidden))
    p["fus_ln1_g"] = rnd((1, fusion_hidden), 1.0) + 1.0
    p["fus_ln1_b"] = rnd((1, fusion_hidden))
    p["fus_w2"] = rnd((fusion_hidden, bert_hidden))
    p["fus_b2"] = rnd((1, bert_hidden))
    p["fus_ln2_g"] = rnd((1, bert_hidden), 1.0) + 1.0
    p["fus_ln2_b"] = rnd((1, bert_hidden))
    # classifier
    p["cls_w1"] = rnd((bert_hidden, hidden))
    p["cls_b1"] = rnd((1, hidden))
    p["cls_w2"] = rnd((hidden, num_classes))
    p["cls_b2"] = rnd((1, num_classes))
    return p


# --------------------------------------------------------------------------
# One-time transform: raw params -> kernel-ready params.
#   * bf16 matmul weights (incl. attention matrices)
#   * eval BatchNorm folded into scale/shift
#   * per-head att vectors packed into a block-structured [H*F, 2H] bf16 matrix
#   * all tiny [1,C] vectors packed into two lane-dense slabs
#   * classifier output weights padded to 128 lanes
# --------------------------------------------------------------------------
def _build_att_matrix(att_src, att_dst):
    heads, fh = att_src.shape
    a = jnp.zeros((heads * fh, 2 * heads), F32)
    for h in range(heads):
        a = a.at[h * fh:(h + 1) * fh, h].set(att_src[h])
        a = a.at[h * fh:(h + 1) * fh, heads + h].set(att_dst[h])
    return a.astype(BF16)


def _row(v, width):
    return jnp.zeros((1, width), F32).at[:, :v.shape[1]].set(v)


def prepare_kernel_params(p, *, num_classes):
    def fold_bn(g, b, mean, var):
        s = g * jax.lax.rsqrt(var + 1e-5)
        return s, b - mean * s

    bn1_s, bn1_t = fold_bn(p["bn1_g"], p["bn1_b"], p["bn1_mean"], p["bn1_var"])
    bn2_s, bn2_t = fold_bn(p["bn2_g"], p["bn2_b"], p["bn2_mean"], p["bn2_var"])

    hidden = p["cls_w2"].shape[0]
    cls_w2 = jnp.zeros((hidden, OUT_PAD), F32).at[:, :num_classes].set(p["cls_w2"])
    cls_b2 = jnp.zeros((1, OUT_PAD), F32).at[:, :num_classes].set(p["cls_b2"])

    rows128 = [p["gat1_b"], bn1_s, bn1_t, p["gat2_b"], bn2_s, bn2_t,
               p["proj_b"], p["emb_mask"], p["emb_node"],
               p["fus_b2"], p["fus_ln2_g"], p["fus_ln2_b"],
               p["cls_b1"], cls_b2]
    vec128 = jnp.concatenate(
        [_row(v, 128) for v in rows128]
        + [jnp.zeros((N_ROWS_128 - len(rows128), 128), F32)], axis=0)

    fusion = p["fus_b1"].shape[1]
    rows512 = [p["fus_b1"], p["fus_ln1_g"], p["fus_ln1_b"]]
    vec512 = jnp.concatenate(
        [_row(v, fusion) for v in rows512]
        + [jnp.zeros((N_ROWS_512 - len(rows512), fusion), F32)], axis=0)

    return {
        "gat1_w": p["gat1_w"].astype(BF16),
        "gat1_att": _build_att_matrix(p["gat1_asrc"], p["gat1_adst"]),
        "gat2_w": p["gat2_w"].astype(BF16),
        "gat2_att": _build_att_matrix(p["gat2_asrc"], p["gat2_adst"]),
        "proj_w": p["proj_w"].astype(BF16),
        "fus_w1": p["fus_w1"].astype(BF16),
        "fus_w2": p["fus_w2"].astype(BF16),
        "cls_w1": p["cls_w1"].astype(BF16),
        "cls_w2_pad": cls_w2.astype(BF16),
        "vec128": vec128,
        "vec512": vec512,
    }


# --------------------------------------------------------------------------
# Full forward: one fused pallas_call (14 operands, all VMEM-resident).
# --------------------------------------------------------------------------
def graph_masked_lm_forward(kp, x, edge_index, mask, *, num_classes):
    n = x.shape[0]
    # Dense int8 adjacency: adj[i, j] = 1 <=> edge j -> i; plus self-loops
    # (matches torch_geometric GATConv's add_self_loops=True).
    adj = jnp.zeros((n, n), jnp.int8)
    adj = adj.at[edge_index[1], edge_index[0]].set(1)
    idx = jnp.arange(n)
    adj = adj.at[idx, idx].set(1)
    mask_f = mask.astype(F32).reshape(n, 1)

    logits_pad = pl.pallas_call(
        _gmlm_kernel,
        out_shape=jax.ShapeDtypeStruct((n, OUT_PAD), F32),
        in_specs=[pl.BlockSpec(memory_space=pltpu.MemorySpace.VMEM)] * 14,
        out_specs=pl.BlockSpec(memory_space=pltpu.MemorySpace.VMEM),
    )(x, adj, mask_f,
      kp["gat1_w"], kp["gat1_att"], kp["gat2_w"], kp["gat2_att"],
      kp["proj_w"], kp["fus_w1"], kp["fus_w2"],
      kp["cls_w1"], kp["cls_w2_pad"], kp["vec128"], kp["vec512"])
    return logits_pad[:, :num_classes]


# --------------------------------------------------------------------------
if __name__ == "__main__":
    N = 16              # number of graph nodes
    IN_CHANNELS = 16
    HIDDEN = 8
    NHEAD = 4
    BERT_HIDDEN = 128   # small stand-in for encoder.config.hidden_size
    FUSION_HIDDEN = 512
    NUM_CLASSES = 4

    key = jax.random.PRNGKey(0)
    k_param, k_x = jax.random.split(key)

    params = init_params(k_param, in_channels=IN_CHANNELS, hidden=HIDDEN,
                         nhead=NHEAD, bert_hidden=BERT_HIDDEN,
                         fusion_hidden=FUSION_HIDDEN, num_classes=NUM_CLASSES)
    kparams = prepare_kernel_params(params, num_classes=NUM_CLASSES)

    x = jax.random.normal(k_x, (N, IN_CHANNELS), dtype=F32)
    # ring graph, both directions: E = 2N edges
    src = jnp.arange(N, dtype=jnp.int32)
    dst = (src + 1) % N
    edge_index = jnp.concatenate(
        [jnp.stack([src, dst]), jnp.stack([dst, src])], axis=1)   # [2, 2N]
    mask = (jnp.arange(N) % 3 == 0)                               # [N] bool

    fwd = jax.jit(functools.partial(graph_masked_lm_forward,
                                    num_classes=NUM_CLASSES))
    logits = fwd(kparams, x, edge_index, mask)
    jax.block_until_ready(logits)
    assert logits.shape == (N, NUM_CLASSES)
    assert bool(jnp.all(jnp.isfinite(logits)))
    print("KERNEL_OK")
</pallas_src>

<mosaic_0001>
module attributes {stable_mosaic.version = 11 : i64} {
  func.func @_gmlm_kernel(%arg0: memref<16x16xf32, #tpu.memory_space<vmem>>, %arg1: memref<16x16xi8, #tpu.memory_space<vmem>>, %arg2: memref<16x1xf32, #tpu.memory_space<vmem>>, %arg3: memref<16x32xbf16, #tpu.memory_space<vmem>>, %arg4: memref<32x8xbf16, #tpu.memory_space<vmem>>, %arg5: memref<32x16xbf16, #tpu.memory_space<vmem>>, %arg6: memref<16x4xbf16, #tpu.memory_space<vmem>>, %arg7: memref<16x128xbf16, #tpu.memory_space<vmem>>, %arg8: memref<256x512xbf16, #tpu.memory_space<vmem>>, %arg9: memref<512x128xbf16, #tpu.memory_space<vmem>>, %arg10: memref<128x8xbf16, #tpu.memory_space<vmem>>, %arg11: memref<8x128xbf16, #tpu.memory_space<vmem>>, %arg12: memref<16x128xf32, #tpu.memory_space<vmem>>, %arg13: memref<8x512xf32, #tpu.memory_space<vmem>>, %arg14: memref<16x128xf32, #tpu.memory_space<vmem>>) attributes {dimension_semantics = [], scalar_prefetch = 0 : i64, scratch_operands = 0 : i64, tpu.core_type = #tpu.core_type<tc>} {
    %c0 = arith.constant 0 : index
    %c0_0 = arith.constant 0 : index
    %0 = vector.load %arg1[%c0, %c0_0] : memref<16x16xi8, #tpu.memory_space<vmem>>, vector<16x16xi8>
    %1 = arith.sitofp %0 : vector<16x16xi8> to vector<16x16xf32>
    %cst = arith.constant 0.000000e+00 : f32
    %2 = vector.broadcast %cst : f32 to vector<16x16xf32>
    %3 = arith.cmpf ogt, %1, %2 : vector<16x16xf32>
    %cst_1 = arith.constant 0.000000e+00 : f32
    %cst_2 = arith.constant -1.000000e+30 : f32
    %4 = vector.broadcast %cst_1 : f32 to vector<16x16xf32>
    %5 = vector.broadcast %cst_2 : f32 to vector<16x16xf32>
    %6 = arith.select %3, %4, %5 : vector<16x16xi1>, vector<16x16xf32>
    %c0_3 = arith.constant 0 : index
    %c0_4 = arith.constant 0 : index
    %7 = vector.load %arg0[%c0_3, %c0_4] : memref<16x16xf32, #tpu.memory_space<vmem>>, vector<16x16xf32>
    %c0_5 = arith.constant 0 : index
    %c0_6 = arith.constant 0 : index
    %8 = vector.load %arg12[%c0_5, %c0_6] : memref<16x128xf32, #tpu.memory_space<vmem>>, vector<1x32xf32>
    %9 = arith.truncf %7 : vector<16x16xf32> to vector<16x16xbf16>
    %c0_7 = arith.constant 0 : index
    %c0_8 = arith.constant 0 : index
    %10 = vector.load %arg3[%c0_7, %c0_8] : memref<16x32xbf16, #tpu.memory_space<vmem>>, vector<16x32xbf16>
    %cst_9 = arith.constant dense<0.000000e+00> : vector<16x32xf32>
    %11 = tpu.matmul %9, %10, %cst_9 {dimension_numbers = #tpu.dot_dimension_numbers<[1], [0], [0], [1], [0, 0, 1, 1], [], []>} : vector<16x16xbf16>, vector<16x32xbf16>, vector<16x32xf32> -> vector<16x32xf32>
    %12 = arith.truncf %11 : vector<16x32xf32> to vector<16x32xbf16>
    %c0_10 = arith.constant 0 : index
    %c0_11 = arith.constant 0 : index
    %13 = vector.load %arg4[%c0_10, %c0_11] : memref<32x8xbf16, #tpu.memory_space<vmem>>, vector<32x8xbf16>
    %cst_12 = arith.constant dense<0.000000e+00> : vector<16x8xf32>
    %14 = tpu.matmul %12, %13, %cst_12 {dimension_numbers = #tpu.dot_dimension_numbers<[1], [0], [0], [1], [0, 0, 1, 1], [], []>} : vector<16x32xbf16>, vector<32x8xbf16>, vector<16x8xf32> -> vector<16x8xf32>
    %15 = tpu.transpose %14, [1, 0] : vector<16x8xf32> -> vector<8x16xf32>
    %16 = vector.extract_strided_slice %14 {offsets = [0, 4], sizes = [16, 1], strides = [1, 1]} : vector<16x8xf32> to vector<16x1xf32>
    %17 = vector.extract_strided_slice %14 {offsets = [0, 5], sizes = [16, 1], strides = [1, 1]} : vector<16x8xf32> to vector<16x1xf32>
    %18 = vector.extract_strided_slice %14 {offsets = [0, 6], sizes = [16, 1], strides = [1, 1]} : vector<16x8xf32> to vector<16x1xf32>
    %19 = vector.extract_strided_slice %14 {offsets = [0, 7], sizes = [16, 1], strides = [1, 1]} : vector<16x8xf32> to vector<16x1xf32>
    %20 = tpu.concatenate %16, %17, %18, %19 in 0 : vector<16x1xf32>, vector<16x1xf32>, vector<16x1xf32>, vector<16x1xf32> -> vector<64x1xf32>
    %21 = vector.extract_strided_slice %15 {offsets = [0, 0], sizes = [1, 16], strides = [1, 1]} : vector<8x16xf32> to vector<1x16xf32>
    %22 = vector.shape_cast %21 : vector<1x16xf32> to vector<1x16xf32>
    %23 = vector.broadcast %22 : vector<1x16xf32> to vector<16x16xf32>
    %24 = vector.extract_strided_slice %15 {offsets = [1, 0], sizes = [1, 16], strides = [1, 1]} : vector<8x16xf32> to vector<1x16xf32>
    %25 = vector.shape_cast %24 : vector<1x16xf32> to vector<1x16xf32>
    %26 = vector.broadcast %25 : vector<1x16xf32> to vector<16x16xf32>
    %27 = vector.extract_strided_slice %15 {offsets = [2, 0], sizes = [1, 16], strides = [1, 1]} : vector<8x16xf32> to vector<1x16xf32>
    %28 = vector.shape_cast %27 : vector<1x16xf32> to vector<1x16xf32>
    %29 = vector.broadcast %28 : vector<1x16xf32> to vector<16x16xf32>
    %30 = vector.extract_strided_slice %15 {offsets = [3, 0], sizes = [1, 16], strides = [1, 1]} : vector<8x16xf32> to vector<1x16xf32>
    %31 = vector.shape_cast %30 : vector<1x16xf32> to vector<1x16xf32>
    %32 = vector.broadcast %31 : vector<1x16xf32> to vector<16x16xf32>
    %33 = tpu.concatenate %23, %26, %29, %32 in 0 : vector<16x16xf32>, vector<16x16xf32>, vector<16x16xf32>, vector<16x16xf32> -> vector<64x16xf32>
    %34 = tpu.concatenate %6, %6, %6, %6 in 0 : vector<16x16xf32>, vector<16x16xf32>, vector<16x16xf32>, vector<16x16xf32> -> vector<64x16xf32>
    %35 = vector.broadcast %20 : vector<64x1xf32> to vector<64x16xf32>
    %36 = arith.addf %35, %33 : vector<64x16xf32>
    %cst_13 = arith.constant 2.000000e-01 : f32
    %37 = vector.broadcast %cst_13 : f32 to vector<64x16xf32>
    %38 = arith.mulf %37, %36 : vector<64x16xf32>
    %39 = arith.maximumf %36, %38 : vector<64x16xf32>
    %40 = arith.addf %39, %34 : vector<64x16xf32>
    %cst_14 = arith.constant dense<0xFF800000> : vector<64xf32>
    %41 = vector.multi_reduction <maximumf>, %40, %cst_14 [1] : vector<64x16xf32> to vector<64xf32>
    %42 = vector.shape_cast %41 : vector<64xf32> to vector<64x1xf32>
    %43 = vector.broadcast %42 : vector<64x1xf32> to vector<64x16xf32>
    %44 = arith.subf %40, %43 : vector<64x16xf32>
    %45 = math.exp %44 : vector<64x16xf32>
    %cst_15 = arith.constant dense<0.000000e+00> : vector<64xf32>
    %46 = vector.multi_reduction <add>, %45, %cst_15 [1] : vector<64x16xf32> to vector<64xf32>
    %47 = vector.shape_cast %46 : vector<64xf32> to vector<64x1xf32>
    %48 = tpu.reciprocal %47 {approx = true} : vector<64x1xf32> -> vector<64x1xf32>
    %49 = vector.broadcast %48 : vector<64x1xf32> to vector<64x16xf32>
    %50 = arith.mulf %45, %49 : vector<64x16xf32>
    %51 = arith.truncf %50 : vector<64x16xf32> to vector<64x16xbf16>
    %cst_16 = arith.constant dense<0.000000e+00> : vector<64x32xf32>
    %52 = tpu.matmul %51, %12, %cst_16 {dimension_numbers = #tpu.dot_dimension_numbers<[1], [0], [0], [1], [0, 0, 1, 1], [], []>} : vector<64x16xbf16>, vector<16x32xbf16>, vector<64x32xf32> -> vector<64x32xf32>
    %53 = vector.extract_strided_slice %52 {offsets = [0, 0], sizes = [16, 8], strides = [1, 1]} : vector<64x32xf32> to vector<16x8xf32>
    %54 = vector.extract_strided_slice %52 {offsets = [16, 8], sizes = [16, 8], strides = [1, 1]} : vector<64x32xf32> to vector<16x8xf32>
    %55 = vector.extract_strided_slice %52 {offsets = [32, 16], sizes = [16, 8], strides = [1, 1]} : vector<64x32xf32> to vector<16x8xf32>
    %56 = vector.extract_strided_slice %52 {offsets = [48, 24], sizes = [16, 8], strides = [1, 1]} : vector<64x32xf32> to vector<16x8xf32>
    %57 = tpu.concatenate %53, %54, %55, %56 in 1 : vector<16x8xf32>, vector<16x8xf32>, vector<16x8xf32>, vector<16x8xf32> -> vector<16x32xf32>
    %58 = vector.broadcast %8 : vector<1x32xf32> to vector<16x32xf32>
    %59 = arith.addf %57, %58 : vector<16x32xf32>
    %c1 = arith.constant 1 : index
    %c0_17 = arith.constant 0 : index
    %60 = vector.load %arg12[%c1, %c0_17] : memref<16x128xf32, #tpu.memory_space<vmem>>, vector<1x32xf32>
    %c2 = arith.constant 2 : index
    %c0_18 = arith.constant 0 : index
    %61 = vector.load %arg12[%c2, %c0_18] : memref<16x128xf32, #tpu.memory_space<vmem>>, vector<1x32xf32>
    %62 = vector.broadcast %60 : vector<1x32xf32> to vector<16x32xf32>
    %63 = arith.mulf %59, %62 : vector<16x32xf32>
    %64 = vector.broadcast %61 : vector<1x32xf32> to vector<16x32xf32>
    %65 = arith.addf %63, %64 : vector<16x32xf32>
    %cst_19 = arith.constant 0.000000e+00 : f32
    %66 = vector.broadcast %cst_19 : f32 to vector<16x32xf32>
    %67 = arith.cmpf ogt, %65, %66 : vector<16x32xf32>
    %cst_20 = arith.constant 0.000000e+00 : f32
    %68 = vector.broadcast %cst_20 : f32 to vector<16x32xf32>
    %69 = arith.minimumf %65, %68 : vector<16x32xf32>
    %70 = math.exp %69 : vector<16x32xf32>
    %cst_21 = arith.constant 1.000000e+00 : f32
    %71 = vector.broadcast %cst_21 : f32 to vector<16x32xf32>
    %72 = arith.subf %70, %71 : vector<16x32xf32>
    %73 = arith.select %67, %65, %72 : vector<16x32xi1>, vector<16x32xf32>
    %c3 = arith.constant 3 : index
    %c0_22 = arith.constant 0 : index
    %74 = vector.load %arg12[%c3, %c0_22] : memref<16x128xf32, #tpu.memory_space<vmem>>, vector<1x16xf32>
    %75 = arith.truncf %73 : vector<16x32xf32> to vector<16x32xbf16>
    %c0_23 = arith.constant 0 : index
    %c0_24 = arith.constant 0 : index
    %76 = vector.load %arg5[%c0_23, %c0_24] : memref<32x16xbf16, #tpu.memory_space<vmem>>, vector<32x16xbf16>
    %cst_25 = arith.constant dense<0.000000e+00> : vector<16x16xf32>
    %77 = tpu.matmul %75, %76, %cst_25 {dimension_numbers = #tpu.dot_dimension_numbers<[1], [0], [0], [1], [0, 0, 1, 1], [], []>} : vector<16x32xbf16>, vector<32x16xbf16>, vector<16x16xf32> -> vector<16x16xf32>
    %78 = arith.truncf %77 : vector<16x16xf32> to vector<16x16xbf16>
    %c0_26 = arith.constant 0 : index
    %c0_27 = arith.constant 0 : index
    %79 = vector.load %arg6[%c0_26, %c0_27] : memref<16x4xbf16, #tpu.memory_space<vmem>>, vector<16x4xbf16>
    %cst_28 = arith.constant dense<0.000000e+00> : vector<16x4xf32>
    %80 = tpu.matmul %78, %79, %cst_28 {dimension_numbers = #tpu.dot_dimension_numbers<[1], [0], [0], [1], [0, 0, 1, 1], [], []>} : vector<16x16xbf16>, vector<16x4xbf16>, vector<16x4xf32> -> vector<16x4xf32>
    %81 = tpu.transpose %80, [1, 0] : vector<16x4xf32> -> vector<4x16xf32>
    %82 = vector.extract_strided_slice %80 {offsets = [0, 2], sizes = [16, 1], strides = [1, 1]} : vector<16x4xf32> to vector<16x1xf32>
    %83 = vector.extract_strided_slice %80 {offsets = [0, 3], sizes = [16, 1], strides = [1, 1]} : vector<16x4xf32> to vector<16x1xf32>
    %84 = tpu.concatenate %82, %83 in 0 : vector<16x1xf32>, vector<16x1xf32> -> vector<32x1xf32>
    %85 = vector.extract_strided_slice %81 {offsets = [0, 0], sizes = [1, 16], strides = [1, 1]} : vector<4x16xf32> to vector<1x16xf32>
    %86 = vector.shape_cast %85 : vector<1x16xf32> to vector<1x16xf32>
    %87 = vector.broadcast %86 : vector<1x16xf32> to vector<16x16xf32>
    %88 = vector.extract_strided_slice %81 {offsets = [1, 0], sizes = [1, 16], strides = [1, 1]} : vector<4x16xf32> to vector<1x16xf32>
    %89 = vector.shape_cast %88 : vector<1x16xf32> to vector<1x16xf32>
    %90 = vector.broadcast %89 : vector<1x16xf32> to vector<16x16xf32>
    %91 = tpu.concatenate %87, %90 in 0 : vector<16x16xf32>, vector<16x16xf32> -> vector<32x16xf32>
    %92 = tpu.concatenate %6, %6 in 0 : vector<16x16xf32>, vector<16x16xf32> -> vector<32x16xf32>
    %93 = vector.broadcast %84 : vector<32x1xf32> to vector<32x16xf32>
    %94 = arith.addf %93, %91 : vector<32x16xf32>
    %cst_29 = arith.constant 2.000000e-01 : f32
    %95 = vector.broadcast %cst_29 : f32 to vector<32x16xf32>
    %96 = arith.mulf %95, %94 : vector<32x16xf32>
    %97 = arith.maximumf %94, %96 : vector<32x16xf32>
    %98 = arith.addf %97, %92 : vector<32x16xf32>
    %cst_30 = arith.constant dense<0xFF800000> : vector<32xf32>
    %99 = vector.multi_reduction <maximumf>, %98, %cst_30 [1] : vector<32x16xf32> to vector<32xf32>
    %100 = vector.shape_cast %99 : vector<32xf32> to vector<32x1xf32>
    %101 = vector.broadcast %100 : vector<32x1xf32> to vector<32x16xf32>
    %102 = arith.subf %98, %101 : vector<32x16xf32>
    %103 = math.exp %102 : vector<32x16xf32>
    %cst_31 = arith.constant dense<0.000000e+00> : vector<32xf32>
    %104 = vector.multi_reduction <add>, %103, %cst_31 [1] : vector<32x16xf32> to vector<32xf32>
    %105 = vector.shape_cast %104 : vector<32xf32> to vector<32x1xf32>
    %106 = tpu.reciprocal %105 {approx = true} : vector<32x1xf32> -> vector<32x1xf32>
    %107 = vector.broadcast %106 : vector<32x1xf32> to vector<32x16xf32>
    %108 = arith.mulf %103, %107 : vector<32x16xf32>
    %109 = arith.truncf %108 : vector<32x16xf32> to vector<32x16xbf16>
    %cst_32 = arith.constant dense<0.000000e+00> : vector<32x16xf32>
    %110 = tpu.matmul %109, %78, %cst_32 {dimension_numbers = #tpu.dot_dimension_numbers<[1], [0], [0], [1], [0, 0, 1, 1], [], []>} : vector<32x16xbf16>, vector<16x16xbf16>, vector<32x16xf32> -> vector<32x16xf32>
    %111 = vector.extract_strided_slice %110 {offsets = [0, 0], sizes = [16, 8], strides = [1, 1]} : vector<32x16xf32> to vector<16x8xf32>
    %112 = vector.extract_strided_slice %110 {offsets = [16, 8], sizes = [16, 8], strides = [1, 1]} : vector<32x16xf32> to vector<16x8xf32>
    %113 = tpu.concatenate %111, %112 in 1 : vector<16x8xf32>, vector<16x8xf32> -> vector<16x16xf32>
    %114 = vector.broadcast %74 : vector<1x16xf32> to vector<16x16xf32>
    %115 = arith.addf %113, %114 : vector<16x16xf32>
    %c4 = arith.constant 4 : index
    %c0_33 = arith.constant 0 : index
    %116 = vector.load %arg12[%c4, %c0_33] : memref<16x128xf32, #tpu.memory_space<vmem>>, vector<1x16xf32>
    %c5 = arith.constant 5 : index
    %c0_34 = arith.constant 0 : index
    %117 = vector.load %arg12[%c5, %c0_34] : memref<16x128xf32, #tpu.memory_space<vmem>>, vector<1x16xf32>
    %118 = vector.broadcast %116 : vector<1x16xf32> to vector<16x16xf32>
    %119 = arith.mulf %115, %118 : vector<16x16xf32>
    %120 = vector.broadcast %117 : vector<1x16xf32> to vector<16x16xf32>
    %121 = arith.addf %119, %120 : vector<16x16xf32>
    %cst_35 = arith.constant 0.000000e+00 : f32
    %122 = vector.broadcast %cst_35 : f32 to vector<16x16xf32>
    %123 = arith.cmpf ogt, %121, %122 : vector<16x16xf32>
    %cst_36 = arith.constant 0.000000e+00 : f32
    %124 = vector.broadcast %cst_36 : f32 to vector<16x16xf32>
    %125 = arith.minimumf %121, %124 : vector<16x16xf32>
    %126 = math.exp %125 : vector<16x16xf32>
    %cst_37 = arith.constant 1.000000e+00 : f32
    %127 = vector.broadcast %cst_37 : f32 to vector<16x16xf32>
    %128 = arith.subf %126, %127 : vector<16x16xf32>
    %129 = arith.select %123, %121, %128 : vector<16x16xi1>, vector<16x16xf32>
    %130 = arith.truncf %129 : vector<16x16xf32> to vector<16x16xbf16>
    %c0_38 = arith.constant 0 : index
    %c0_39 = arith.constant 0 : index
    %131 = vector.load %arg7[%c0_38, %c0_39] : memref<16x128xbf16, #tpu.memory_space<vmem>>, vector<16x128xbf16>
    %cst_40 = arith.constant dense<0.000000e+00> : vector<16x128xf32>
    %132 = tpu.matmul %130, %131, %cst_40 {dimension_numbers = #tpu.dot_dimension_numbers<[1], [0], [0], [1], [0, 0, 1, 1], [], []>} : vector<16x16xbf16>, vector<16x128xbf16>, vector<16x128xf32> -> vector<16x128xf32>
    %c6 = arith.constant 6 : index
    %c0_41 = arith.constant 0 : index
    %133 = vector.load %arg12[%c6, %c0_41] : memref<16x128xf32, #tpu.memory_space<vmem>>, vector<1x128xf32>
    %134 = vector.broadcast %133 : vector<1x128xf32> to vector<16x128xf32>
    %135 = arith.addf %132, %134 : vector<16x128xf32>
    %c0_42 = arith.constant 0 : index
    %c0_43 = arith.constant 0 : index
    %136 = vector.load %arg2[%c0_42, %c0_43] : memref<16x1xf32, #tpu.memory_space<vmem>>, vector<16x1xf32>
    %c7 = arith.constant 7 : index
    %c0_44 = arith.constant 0 : index
    %137 = vector.load %arg12[%c7, %c0_44] : memref<16x128xf32, #tpu.memory_space<vmem>>, vector<1x128xf32>
    %138 = vector.broadcast %136 : vector<16x1xf32> to vector<16x128xf32>
    %139 = vector.broadcast %137 : vector<1x128xf32> to vector<16x128xf32>
    %140 = arith.mulf %138, %139 : vector<16x128xf32>
    %cst_45 = arith.constant 1.000000e+00 : f32
    %141 = vector.broadcast %cst_45 : f32 to vector<16x1xf32>
    %142 = arith.subf %141, %136 : vector<16x1xf32>
    %c8 = arith.constant 8 : index
    %c0_46 = arith.constant 0 : index
    %143 = vector.load %arg12[%c8, %c0_46] : memref<16x128xf32, #tpu.memory_space<vmem>>, vector<1x128xf32>
    %144 = vector.broadcast %142 : vector<16x1xf32> to vector<16x128xf32>
    %145 = vector.broadcast %143 : vector<1x128xf32> to vector<16x128xf32>
    %146 = arith.mulf %144, %145 : vector<16x128xf32>
    %147 = arith.addf %140, %146 : vector<16x128xf32>
    %148 = tpu.concatenate %135, %147 in 1 : vector<16x128xf32>, vector<16x128xf32> -> vector<16x256xf32>
    %149 = arith.truncf %148 : vector<16x256xf32> to vector<16x256xbf16>
    %c0_47 = arith.constant 0 : index
    %c0_48 = arith.constant 0 : index
    %150 = vector.load %arg8[%c0_47, %c0_48] : memref<256x512xbf16, #tpu.memory_space<vmem>>, vector<256x512xbf16>
    %cst_49 = arith.constant dense<0.000000e+00> : vector<16x512xf32>
    %151 = tpu.matmul %149, %150, %cst_49 {dimension_numbers = #tpu.dot_dimension_numbers<[1], [0], [0], [1], [0, 0, 1, 1], [], []>} : vector<16x256xbf16>, vector<256x512xbf16>, vector<16x512xf32> -> vector<16x512xf32>
    %c0_50 = arith.constant 0 : index
    %c0_51 = arith.constant 0 : index
    %152 = vector.load %arg13[%c0_50, %c0_51] : memref<8x512xf32, #tpu.memory_space<vmem>>, vector<1x512xf32>
    %153 = vector.broadcast %152 : vector<1x512xf32> to vector<16x512xf32>
    %154 = arith.addf %151, %153 : vector<16x512xf32>
    %c1_52 = arith.constant 1 : index
    %c0_53 = arith.constant 0 : index
    %155 = vector.load %arg13[%c1_52, %c0_53] : memref<8x512xf32, #tpu.memory_space<vmem>>, vector<1x512xf32>
    %c2_54 = arith.constant 2 : index
    %c0_55 = arith.constant 0 : index
    %156 = vector.load %arg13[%c2_54, %c0_55] : memref<8x512xf32, #tpu.memory_space<vmem>>, vector<1x512xf32>
    %cst_56 = arith.constant dense<0.000000e+00> : vector<16xf32>
    %157 = vector.multi_reduction <add>, %154, %cst_56 [1] : vector<16x512xf32> to vector<16xf32>
    %158 = vector.shape_cast %157 : vector<16xf32> to vector<16x1xf32>
    %cst_57 = arith.constant 5.120000e+02 : f32
    %159 = vector.broadcast %cst_57 : f32 to vector<16x1xf32>
    %160 = arith.divf %158, %159 : vector<16x1xf32>
    %161 = vector.broadcast %160 : vector<16x1xf32> to vector<16x512xf32>
    %162 = arith.subf %154, %161 : vector<16x512xf32>
    %163 = arith.mulf %162, %162 : vector<16x512xf32>
    %cst_58 = arith.constant dense<0.000000e+00> : vector<16xf32>
    %164 = vector.multi_reduction <add>, %163, %cst_58 [1] : vector<16x512xf32> to vector<16xf32>
    %165 = vector.shape_cast %164 : vector<16xf32> to vector<16x1xf32>
    %cst_59 = arith.constant 5.120000e+02 : f32
    %166 = vector.broadcast %cst_59 : f32 to vector<16x1xf32>
    %167 = arith.divf %165, %166 : vector<16x1xf32>
    %168 = vector.broadcast %160 : vector<16x1xf32> to vector<16x512xf32>
    %169 = arith.subf %154, %168 : vector<16x512xf32>
    %cst_60 = arith.constant 9.99999974E-6 : f32
    %170 = vector.broadcast %cst_60 : f32 to vector<16x1xf32>
    %171 = arith.addf %167, %170 : vector<16x1xf32>
    %172 = math.rsqrt %171 : vector<16x1xf32>
    %173 = vector.broadcast %172 : vector<16x1xf32> to vector<16x512xf32>
    %174 = arith.mulf %169, %173 : vector<16x512xf32>
    %175 = vector.broadcast %155 : vector<1x512xf32> to vector<16x512xf32>
    %176 = arith.mulf %174, %175 : vector<16x512xf32>
    %177 = vector.broadcast %156 : vector<1x512xf32> to vector<16x512xf32>
    %178 = arith.addf %176, %177 : vector<16x512xf32>
    %cst_61 = arith.constant 0.000000e+00 : f32
    %179 = vector.broadcast %cst_61 : f32 to vector<16x512xf32>
    %180 = arith.maximumf %178, %179 : vector<16x512xf32>
    %181 = arith.truncf %180 : vector<16x512xf32> to vector<16x512xbf16>
    %c0_62 = arith.constant 0 : index
    %c0_63 = arith.constant 0 : index
    %182 = vector.load %arg9[%c0_62, %c0_63] : memref<512x128xbf16, #tpu.memory_space<vmem>>, vector<512x128xbf16>
    %cst_64 = arith.constant dense<0.000000e+00> : vector<16x128xf32>
    %183 = tpu.matmul %181, %182, %cst_64 {dimension_numbers = #tpu.dot_dimension_numbers<[1], [0], [0], [1], [0, 0, 1, 1], [], []>} : vector<16x512xbf16>, vector<512x128xbf16>, vector<16x128xf32> -> vector<16x128xf32>
    %c9 = arith.constant 9 : index
    %c0_65 = arith.constant 0 : index
    %184 = vector.load %arg12[%c9, %c0_65] : memref<16x128xf32, #tpu.memory_space<vmem>>, vector<1x128xf32>
    %185 = vector.broadcast %184 : vector<1x128xf32> to vector<16x128xf32>
    %186 = arith.addf %183, %185 : vector<16x128xf32>
    %c10 = arith.constant 10 : index
    %c0_66 = arith.constant 0 : index
    %187 = vector.load %arg12[%c10, %c0_66] : memref<16x128xf32, #tpu.memory_space<vmem>>, vector<1x128xf32>
    %c11 = arith.constant 11 : index
    %c0_67 = arith.constant 0 : index
    %188 = vector.load %arg12[%c11, %c0_67] : memref<16x128xf32, #tpu.memory_space<vmem>>, vector<1x128xf32>
    %cst_68 = arith.constant dense<0.000000e+00> : vector<16xf32>
    %189 = vector.multi_reduction <add>, %186, %cst_68 [1] : vector<16x128xf32> to vector<16xf32>
    %190 = vector.shape_cast %189 : vector<16xf32> to vector<16x1xf32>
    %cst_69 = arith.constant 1.280000e+02 : f32
    %191 = vector.broadcast %cst_69 : f32 to vector<16x1xf32>
    %192 = arith.divf %190, %191 : vector<16x1xf32>
    %193 = vector.broadcast %192 : vector<16x1xf32> to vector<16x128xf32>
    %194 = arith.subf %186, %193 : vector<16x128xf32>
    %195 = arith.mulf %194, %194 : vector<16x128xf32>
    %cst_70 = arith.constant dense<0.000000e+00> : vector<16xf32>
    %196 = vector.multi_reduction <add>, %195, %cst_70 [1] : vector<16x128xf32> to vector<16xf32>
    %197 = vector.shape_cast %196 : vector<16xf32> to vector<16x1xf32>
    %cst_71 = arith.constant 1.280000e+02 : f32
    %198 = vector.broadcast %cst_71 : f32 to vector<16x1xf32>
    %199 = arith.divf %197, %198 : vector<16x1xf32>
    %200 = vector.broadcast %192 : vector<16x1xf32> to vector<16x128xf32>
    %201 = arith.subf %186, %200 : vector<16x128xf32>
    %cst_72 = arith.constant 9.99999974E-6 : f32
    %202 = vector.broadcast %cst_72 : f32 to vector<16x1xf32>
    %203 = arith.addf %199, %202 : vector<16x1xf32>
    %204 = math.rsqrt %203 : vector<16x1xf32>
    %205 = vector.broadcast %204 : vector<16x1xf32> to vector<16x128xf32>
    %206 = arith.mulf %201, %205 : vector<16x128xf32>
    %207 = vector.broadcast %187 : vector<1x128xf32> to vector<16x128xf32>
    %208 = arith.mulf %206, %207 : vector<16x128xf32>
    %209 = vector.broadcast %188 : vector<1x128xf32> to vector<16x128xf32>
    %210 = arith.addf %208, %209 : vector<16x128xf32>
    %211 = arith.truncf %210 : vector<16x128xf32> to vector<16x128xbf16>
    %c0_73 = arith.constant 0 : index
    %c0_74 = arith.constant 0 : index
    %212 = vector.load %arg10[%c0_73, %c0_74] : memref<128x8xbf16, #tpu.memory_space<vmem>>, vector<128x8xbf16>
    %cst_75 = arith.constant dense<0.000000e+00> : vector<16x8xf32>
    %213 = tpu.matmul %211, %212, %cst_75 {dimension_numbers = #tpu.dot_dimension_numbers<[1], [0], [0], [1], [0, 0, 1, 1], [], []>} : vector<16x128xbf16>, vector<128x8xbf16>, vector<16x8xf32> -> vector<16x8xf32>
    %c12 = arith.constant 12 : index
    %c0_76 = arith.constant 0 : index
    %214 = vector.load %arg12[%c12, %c0_76] : memref<16x128xf32, #tpu.memory_space<vmem>>, vector<1x8xf32>
    %215 = vector.broadcast %214 : vector<1x8xf32> to vector<16x8xf32>
    %216 = arith.addf %213, %215 : vector<16x8xf32>
    %cst_77 = arith.constant 0.000000e+00 : f32
    %217 = vector.broadcast %cst_77 : f32 to vector<16x8xf32>
    %218 = arith.maximumf %216, %217 : vector<16x8xf32>
    %219 = arith.truncf %218 : vector<16x8xf32> to vector<16x8xbf16>
    %c0_78 = arith.constant 0 : index
    %c0_79 = arith.constant 0 : index
    %220 = vector.load %arg11[%c0_78, %c0_79] : memref<8x128xbf16, #tpu.memory_space<vmem>>, vector<8x128xbf16>
    %cst_80 = arith.constant dense<0.000000e+00> : vector<16x128xf32>
    %221 = tpu.matmul %219, %220, %cst_80 {dimension_numbers = #tpu.dot_dimension_numbers<[1], [0], [0], [1], [0, 0, 1, 1], [], []>} : vector<16x8xbf16>, vector<8x128xbf16>, vector<16x128xf32> -> vector<16x128xf32>
    %c13 = arith.constant 13 : index
    %c0_81 = arith.constant 0 : index
    %222 = vector.load %arg12[%c13, %c0_81] : memref<16x128xf32, #tpu.memory_space<vmem>>, vector<1x128xf32>
    %223 = vector.broadcast %222 : vector<1x128xf32> to vector<16x128xf32>
    %224 = arith.addf %221, %223 : vector<16x128xf32>
    %c0_82 = arith.constant 0 : index
    %c0_83 = arith.constant 0 : index
    %225 = vector.load %arg14[%c0_82, %c0_83] : memref<16x128xf32, #tpu.memory_space<vmem>>, vector<16x128xf32>
    tpu.vector_store %arg14[%c0_82, %c0_83], %224 {strides = array<i32>} : memref<16x128xf32, #tpu.memory_space<vmem>>, vector<16x128xf32>,
    return
  }
}

</mosaic_0001>

<llo_original>
// kernel: graph_masked_lm_forward.1
$region0: #{graph_masked_lm_forward.1}
  #allocation0 [shape = 'u32[]', space=smem, size = 0x4, offset = 0x4, fixed_abs, tag = 'smem constant byte address 0x4 - core index']
  #allocation1 [shape = 'u32[144,128]{1,0:T(1,128)}', space=vmem, size = 0x12000, scoped, tag = 'internal scratch']
  %s0 = inlined_call_operand.vmem [shape: f32[16,16], index: 0, kind: input, shape index: {}]
  %s1 = inlined_call_operand.vmem [shape: s8[16,16], index: 1, kind: input, shape index: {}]
  %s2 = inlined_call_operand.vmem [shape: f32[16,1], index: 2, kind: input, shape index: {}]
  %s3 = inlined_call_operand.vmem [shape: bf16[16,32], index: 3, kind: input, shape index: {}]
  %s4 = inlined_call_operand.vmem [shape: bf16[32,8], index: 4, kind: input, shape index: {}]
  %s5 = inlined_call_operand.vmem [shape: bf16[32,16], index: 5, kind: input, shape index: {}]
  %s6 = inlined_call_operand.vmem [shape: bf16[16,4], index: 6, kind: input, shape index: {}]
  %s7 = inlined_call_operand.vmem [shape: bf16[16,128], index: 7, kind: input, shape index: {}]
  %s8 = inlined_call_operand.vmem [shape: bf16[256,512], index: 8, kind: input, shape index: {}]
  %s9 = inlined_call_operand.vmem [shape: bf16[512,128], index: 9, kind: input, shape index: {}]
  %s10 = inlined_call_operand.vmem [shape: bf16[128,8], index: 10, kind: input, shape index: {}]
  %s11 = inlined_call_operand.vmem [shape: bf16[8,128], index: 11, kind: input, shape index: {}]
  %s12 = inlined_call_operand.vmem [shape: f32[16,128], index: 12, kind: input, shape index: {}]
  %s13 = inlined_call_operand.vmem [shape: f32[8,512], index: 13, kind: input, shape index: {}]
  %s14 = inlined_call_operand.vmem [shape: f32[16,128], index: 14, kind: output, shape index: {}]
  %s15 = sld [smem:[#allocation0]]
  $region66: #{graph_masked_lm_forward.1} parent=0
    _
  %s17 = ssub.s32 1, %s15
  %s18 = scalar_select 0, %s17, %s15
  // Predicated region
  $region2: #{graph_masked_lm_forward.1} parent=0 // pred_check
    _
  $region3: #{graph_masked_lm_forward.1} parent=0 // pred_check_branch
    %20 = sbr.rel (0) target = $region5
  $region4: #{graph_masked_lm_forward.1} parent=0 // pred_region
    _
  $region5: #{graph_masked_lm_forward.1} parent=0 // pred_fallthru
    _
  // Predicated region
  $region6: #{graph_masked_lm_forward.1} parent=0 // pred_check
    _
  $region7: #{graph_masked_lm_forward.1} parent=0 // pred_check_branch
    %22 = sbr.rel (0) target = $region9
  $region8: #{graph_masked_lm_forward.1} parent=0 // pred_region
    _
  $region9: #{graph_masked_lm_forward.1} parent=0 // pred_fallthru
    _
  // Predicated region
  $region10: #{graph_masked_lm_forward.1} parent=0 // pred_check
    _
  $region11: #{graph_masked_lm_forward.1} parent=0 // pred_check_branch
    %24 = sbr.rel (0) target = $region13
  $region12: #{graph_masked_lm_forward.1} parent=0 // pred_region
    _
  $region13: #{graph_masked_lm_forward.1} parent=0 // pred_fallthru
    _
  // Predicated region
  $region14: #{graph_masked_lm_forward.1} parent=0 // pred_check
    _
  $region15: #{graph_masked_lm_forward.1} parent=0 // pred_check_branch
    %26 = sbr.rel (0) target = $region17
  $region16: #{graph_masked_lm_forward.1} parent=0 // pred_region
    _
  $region17: #{graph_masked_lm_forward.1} parent=0 // pred_fallthru
    _
  // Predicated region
  $region18: #{graph_masked_lm_forward.1} parent=0 // pred_check
    _
  $region19: #{graph_masked_lm_forward.1} parent=0 // pred_check_branch
    %28 = sbr.rel (0) target = $region21
  $region20: #{graph_masked_lm_forward.1} parent=0 // pred_region
    _
  $region21: #{graph_masked_lm_forward.1} parent=0 // pred_fallthru
    _
  // Predicated region
  $region22: #{graph_masked_lm_forward.1} parent=0 // pred_check
    _
  $region23: #{graph_masked_lm_forward.1} parent=0 // pred_check_branch
    %30 = sbr.rel (0) target = $region25
  $region24: #{graph_masked_lm_forward.1} parent=0 // pred_region
    _
  $region25: #{graph_masked_lm_forward.1} parent=0 // pred_fallthru
    _
  // Predicated region
  $region26: #{graph_masked_lm_forward.1} parent=0 // pred_check
    _
  $region27: #{graph_masked_lm_forward.1} parent=0 // pred_check_branch
    %32 = sbr.rel (0) target = $region29
  $region28: #{graph_masked_lm_forward.1} parent=0 // pred_region
    _
  $region29: #{graph_masked_lm_forward.1} parent=0 // pred_fallthru
    _
  // Predicated region
  $region30: #{graph_masked_lm_forward.1} parent=0 // pred_check
    _
  $region31: #{graph_masked_lm_forward.1} parent=0 // pred_check_branch
    %34 = sbr.rel (0) target = $region33
  $region32: #{graph_masked_lm_forward.1} parent=0 // pred_region
    _
  $region33: #{graph_masked_lm_forward.1} parent=0 // pred_fallthru
    _
  // Predicated region
  $region34: #{graph_masked_lm_forward.1} parent=0 // pred_check
    _
  $region35: #{graph_masked_lm_forward.1} parent=0 // pred_check_branch
    %36 = sbr.rel (0) target = $region37
  $region36: #{graph_masked_lm_forward.1} parent=0 // pred_region
    _
  $region37: #{graph_masked_lm_forward.1} parent=0 // pred_fallthru
    _
  // Predicated region
  $region38: #{graph_masked_lm_forward.1} parent=0 // pred_check
    _
  $region39: #{graph_masked_lm_forward.1} parent=0 // pred_check_branch
    %38 = sbr.rel (0) target = $region41
  $region40: #{graph_masked_lm_forward.1} parent=0 // pred_region
    _
  $region41: #{graph_masked_lm_forward.1} parent=0 // pred_fallthru
    _
  // Predicated region
  $region42: #{graph_masked_lm_forward.1} parent=0 // pred_check
    _
  $region43: #{graph_masked_lm_forward.1} parent=0 // pred_check_branch
    %40 = sbr.rel (0) target = $region45
  $region44: #{graph_masked_lm_forward.1} parent=0 // pred_region
    _
  $region45: #{graph_masked_lm_forward.1} parent=0 // pred_fallthru
    _
  // Predicated region
  $region46: #{graph_masked_lm_forward.1} parent=0 // pred_check
    _
  $region47: #{graph_masked_lm_forward.1} parent=0 // pred_check_branch
    %42 = sbr.rel (0) target = $region49
  $region48: #{graph_masked_lm_forward.1} parent=0 // pred_region
    _
  $region49: #{graph_masked_lm_forward.1} parent=0 // pred_fallthru
    _
  // Predicated region
  $region50: #{graph_masked_lm_forward.1} parent=0 // pred_check
    _
  $region51: #{graph_masked_lm_forward.1} parent=0 // pred_check_branch
    %44 = sbr.rel (0) target = $region53
  $region52: #{graph_masked_lm_forward.1} parent=0 // pred_region
    _
  $region53: #{graph_masked_lm_forward.1} parent=0 // pred_fallthru
    _
  // Predicated region
  $region54: #{graph_masked_lm_forward.1} parent=0 // pred_check
    _
  $region55: #{graph_masked_lm_forward.1} parent=0 // pred_check_branch
    %46 = sbr.rel (0) target = $region57
  $region56: #{graph_masked_lm_forward.1} parent=0 // pred_region
    _
  $region57: #{graph_masked_lm_forward.1} parent=0 // pred_fallthru
    _
  %v48 = vld [vmem:[%s1] sm:$0x3]
  %v49 = vld [vmem:[%s1 + $0x2] sm:$0x3]
  %v50 = vunpack.c.0.s8 %v48
  %v51 = vunpack.c.0.s8 %v49
  %v52 = vcvt.s32.f32 %v50
  %v53 = vcvt.s32.f32 %v51
  %vm54 = vcmp.gt.f32.partialorder %v52, 0.0
  %vm55 = vcmp.gt.f32.partialorder %v53, 0.0
  %v56 = vsel %vm54, 0.0, -1e+30
  %v57 = vsel %vm55, 0.0, -1e+30
  %v58 = vld [vmem:[%s0] sm:$0xff]
  %v59 = vld [vmem:[%s0 + $0x8] sm:$0xff]
  %v60 = vld [vmem:[%s12] sm:$0x1]
  %v61 = vpack.c.bf16 %v59, %v58
  %v62 = vld [vmem:[%s3] sm:$0xf]
  %v63 = vld [vmem:[%s3 + $0x4] sm:$0xf]
  %v66 = vunpack.c.l.b16 %v62
  %v67 = vunpack.c.l.b16 %v63
  %v68 = vpack.c.b16 %v67, %v66
  %vm70 = vcmask 130048
  %v72 = vsel %vm70, %v61, 0
  %74 = vmatprep.subr.bf16.mxu0 0
  %75 = vmatpush1.bf16.msra.mxu0 %v68
  %76 = vmatprep.subr.bf16.mxu0 0
  %77 = vmatpush1.bf16.msra.mxu0 0
  %78 = vmatprep.subr.bf16.mxu0 0
  %79 = vmatpush1.bf16.msra.mxu0 0
  %80 = vmatprep.subr.bf16.mxu0 0
  %81 = vmatpush1.bf16.msra.mxu0 0
  %82 = vmatprep.subr.bf16.mxu0 0
  %83 = vmatpush1.bf16.msra.mxu0 0
  %84 = vmatprep.subr.bf16.mxu0 0
  %85 = vmatpush1.bf16.msra.mxu0 0
  %86 = vmatprep.subr.bf16.mxu0 0
  %87 = vmatpush1.bf16.msra.mxu0 0
  %88 = vmatprep.subr.bf16.mxu0 0
  %89 = vmatpush1.bf16.msra.mxu0 0
  %90 = vmatprep.subr.bf16.mxu0 0
  %91 = vmatpush1.bf16.msra.mxu0 0
  %92 = vmatprep.subr.bf16.mxu0 0
  %93 = vmatpush1.bf16.msra.mxu0 0
  %94 = vmatprep.subr.bf16.mxu0 0
  %95 = vmatpush1.bf16.msra.mxu0 0
  %96 = vmatprep.subr.bf16.mxu0 0
  %97 = vmatpush1.bf16.msra.mxu0 0
  %98 = vmatprep.subr.bf16.mxu0 0
  %99 = vmatpush1.bf16.msra.mxu0 0
  %100 = vmatprep.subr.bf16.mxu0 0
  %101 = vmatpush1.bf16.msra.mxu0 0
  %102 = vmatprep.subr.bf16.mxu0 0
  %103 = vmatpush1.bf16.msra.mxu0 0
  %104 = vmatprep.subr.bf16.mxu0 0
  %105 = vmatpush1.bf16.msra.mxu0 0
  %106 = vmatprep.mubr.bf16.mxu0 0
  %107 = vmatmul.mubr.bf16.gmra.mrb[0].mxu0 %v72
  %v108 = vpop.f32.mrb[0].mxu0
  %v109 = vadd.f32 0.0, %v108
  %v110 = vpop.f32.mrb[0].mxu0
  %v111 = vpop.f32.mrb[0].mxu0
  %v112 = vadd.f32 0.0, %v111
  %v113 = vpop.f32.mrb[0].mxu0
  %114 = vdwg.mxu0
  %v115 = vpack.c.bf16 %v112, %v109
  %v116 = vld [vmem:[%s4] sm:$0xf]
  %v117 = vld [vmem:[%s4 + $0x4] sm:$0xf]
  %v118 = vld [vmem:[%s4 + $0x8] sm:$0xf]
  %v119 = vld [vmem:[%s4 + $0xc] sm:$0xf]
  %v124 = vunpack.c.l.b16 %v116
  %v125 = vunpack.c.l.b16 %v117
  %v126 = vunpack.c.l.b16 %v118
  %v127 = vunpack.c.l.b16 %v119
  %v128 = vpack.c.b16 %v125, %v124
  %v129 = vpack.c.b16 %v127, %v126
  %vm132 = vcmask 261120
  %v134 = vsel %vm132, %v115, 0
  %136 = vmatprep.subr.bf16.mxu0 0
  %137 = vmatpush1.bf16.msra.mxu0 %v128
  %138 = vmatprep.subr.bf16.mxu0 0
  %139 = vmatpush1.bf16.msra.mxu0 %v129
  %140 = vmatprep.subr.bf16.mxu0 0
  %141 = vmatpush1.bf16.msra.mxu0 0
  %142 = vmatprep.subr.bf16.mxu0 0
  %143 = vmatpush1.bf16.msra.mxu0 0
  %144 = vmatprep.subr.bf16.mxu0 0
  %145 = vmatpush1.bf16.msra.mxu0 0
  %146 = vmatprep.subr.bf16.mxu0 0
  %147 = vmatpush1.bf16.msra.mxu0 0
  %148 = vmatprep.subr.bf16.mxu0 0
  %149 = vmatpush1.bf16.msra.mxu0 0
  %150 = vmatprep.subr.bf16.mxu0 0
  %151 = vmatpush1.bf16.msra.mxu0 0
  %152 = vmatprep.subr.bf16.mxu0 0
  %153 = vmatpush1.bf16.msra.mxu0 0
  %154 = vmatprep.subr.bf16.mxu0 0
  %155 = vmatpush1.bf16.msra.mxu0 0
  %156 = vmatprep.subr.bf16.mxu0 0
  %157 = vmatpush1.bf16.msra.mxu0 0
  %158 = vmatprep.subr.bf16.mxu0 0
  %159 = vmatpush1.bf16.msra.mxu0 0
  %160 = vmatprep.subr.bf16.mxu0 0
  %161 = vmatpush1.bf16.msra.mxu0 0
  %162 = vmatprep.subr.bf16.mxu0 0
  %163 = vmatpush1.bf16.msra.mxu0 0
  %164 = vmatprep.subr.bf16.mxu0 0
  %165 = vmatpush1.bf16.msra.mxu0 0
  %166 = vmatprep.subr.bf16.mxu0 0
  %167 = vmatpush1.bf16.msra.mxu0 0
  %168 = vmatprep.mubr.bf16.mxu0 0
  %169 = vmatmul.mubr.bf16.gmra.mrb[0].mxu0 %v134
  %v170 = vpop.f32.mrb[0].mxu0
  %v171 = vadd.f32 0.0, %v170
  %v172 = vpop.f32.mrb[0].mxu0
  %v173 = vpop.f32.mrb[0].mxu0
  %v174 = vadd.f32 0.0, %v173
  %v175 = vpop.f32.mrb[0].mxu0
  %176 = vdwg.mxu0
  %177 = vxpose.xlu0.b32.start [1/16] %v171, 128
  %178 = vxpose.xlu0.b32.cont [2/16] %v174, 128
  %179 = vxpose.xlu0.b32.cont [3/16] 0.0, 128
  %180 = vxpose.xlu0.b32.cont [4/16] 0.0, 128
  %181 = vxpose.xlu0.b32.cont [5/16] 0.0, 128
  %182 = vxpose.xlu0.b32.cont [6/16] 0.0, 128
  %183 = vxpose.xlu0.b32.cont [7/16] 0.0, 128
  %184 = vxpose.xlu0.b32.cont [8/16] 0.0, 128
  %185 = vxpose.xlu0.b32.cont [9/16] 0.0, 128
  %186 = vxpose.xlu0.b32.cont [10/16] 0.0, 128
  %187 = vxpose.xlu0.b32.cont [11/16] 0.0, 128
  %188 = vxpose.xlu0.b32.cont [12/16] 0.0, 128
  %189 = vxpose.xlu0.b32.cont [13/16] 0.0, 128
  %190 = vxpose.xlu0.b32.cont [14/16] 0.0, 128
  %191 = vxpose.xlu0.b32.cont [15/16] 0.0, 128
  %192 = vxpose.xlu0.b32.end [16/16] 0.0, 128
  %v193 = vpop.trf.xlu0
  %v194 = vpop.trf.xlu0
  %v195 = vpop.trf.xlu0
  %v196 = vpop.trf.xlu0
  %v197 = vpop.trf.xlu0
  %v198 = vpop.trf.xlu0
  %v199 = vpop.trf.xlu0
  %v200 = vpop.trf.xlu0
  %v201 = vpop.trf.xlu0
  %v202 = vpop.trf.xlu0
  %v203 = vpop.trf.xlu0
  %v204 = vpop.trf.xlu0
  %v205 = vpop.trf.xlu0
  %v206 = vpop.trf.xlu0
  %v207 = vpop.trf.xlu0
  %v208 = vpop.trf.xlu0
  %211 = vrot.lane.b32.xlu0 %v171, 127
  %v212 = vpop.permute.xlu0 %211
  %213 = vrot.lane.b32.xlu0 %v174, 127
  %v214 = vpop.permute.xlu0 %213
  %215 = vrot.lane.b32.xlu0 %v171, 126
  %v216 = vpop.permute.xlu0 %215
  %217 = vrot.lane.b32.xlu0 %v174, 126
  %v218 = vpop.permute.xlu0 %217
  %219 = vrot.lane.b32.xlu0 %v171, 125
  %v220 = vpop.permute.xlu0 %219
  %221 = vrot.lane.b32.xlu0 %v174, 125
  %v222 = vpop.permute.xlu0 %221
  %v223 = vlaneseq
  %v224 = vshrl.u32 %v223, 7
  %v225 = vsub.s32 0, %v224
  %v226 = vrot.slane %v193, %v225
  %v227 = vlaneseq
  %v228 = vshrl.u32 %v227, 7
  %v229 = vsub.s32 1, %v228
  %v230 = vrot.slane %v193, %v229
  %v231 = vlaneseq
  %v232 = vshrl.u32 %v231, 7
  %v233 = vsub.s32 2, %v232
  %v234 = vrot.slane %v193, %v233
  %v235 = vlaneseq
  %v236 = vshrl.u32 %v235, 7
  %v237 = vsub.s32 3, %v236
  %v238 = vrot.slane %v193, %v237
  %239 = vset.pattern.permute.xlu0 4
  %240 = vperm.xlu0 %239, %v171
  %v241 = vpop.permute.xlu0 %240
  %243 = vset.pattern.permute.xlu0 4
  %244 = vperm.xlu0 %243, %v174
  %v245 = vpop.permute.xlu0 %244
  %247 = vset.pattern.permute.xlu0 4
  %248 = vperm.xlu0 %247, %v212
  %v249 = vpop.permute.xlu0 %248
  %251 = vset.pattern.permute.xlu0 4
  %252 = vperm.xlu0 %251, %v214
  %v253 = vpop.permute.xlu0 %252
  %255 = vset.pattern.permute.xlu0 4
  %256 = vperm.xlu0 %255, %v216
  %v257 = vpop.permute.xlu0 %256
  %259 = vset.pattern.permute.xlu0 4
  %260 = vperm.xlu0 %259, %v218
  %v261 = vpop.permute.xlu0 %260
  %263 = vset.pattern.permute.xlu0 4
  %264 = vperm.xlu0 %263, %v220
  %v265 = vpop.permute.xlu0 %264
  %267 = vset.pattern.permute.xlu0 4
  %268 = vperm.xlu0 %267, %v222
  %v269 = vpop.permute.xlu0 %268
  %v271 = vadd.f32 %v241, %v226
  %v272 = vadd.f32 %v245, %v226
  %v273 = vadd.f32 %v249, %v230
  %v274 = vadd.f32 %v253, %v230
  %v275 = vadd.f32 %v257, %v234
  %v276 = vadd.f32 %v261, %v234
  %v277 = vadd.f32 %v265, %v238
  %v278 = vadd.f32 %v269, %v238
  %v279 = vmul.f32 %v271, 0.2
  %v280 = vmul.f32 %v272, 0.2
  %v281 = vmul.f32 %v273, 0.2
  %v282 = vmul.f32 %v274, 0.2
  %v283 = vmul.f32 %v275, 0.2
  %v284 = vmul.f32 %v276, 0.2
  %v285 = vmul.f32 %v277, 0.2
  %v286 = vmul.f32 %v278, 0.2
  %v287 = vmax.f32 %v271, %v279
  %v288 = vmax.f32 %v272, %v280
  %v289 = vmax.f32 %v273, %v281
  %v290 = vmax.f32 %v274, %v282
  %v291 = vmax.f32 %v275, %v283
  %v292 = vmax.f32 %v276, %v284
  %v293 = vmax.f32 %v277, %v285
  %v294 = vmax.f32 %v278, %v286
  %v295 = vadd.f32 %v287, %v56
  %v296 = vadd.f32 %v288, %v57
  %v297 = vadd.f32 %v289, %v56
  %v298 = vadd.f32 %v290, %v57
  %v299 = vadd.f32 %v291, %v56
  %v300 = vadd.f32 %v292, %v57
  %v301 = vadd.f32 %v293, %v56
  %v302 = vadd.f32 %v294, %v57
  %v303 = vsel %vm70, %v295, -inf
  %304 = vmax.xlane.f32.xlu0 %v303
  %v305 = vpop.xlane.xlu0 %304
  %v306 = vsel %vm70, %v296, -inf
  %307 = vmax.xlane.f32.xlu0 %v306
  %v308 = vpop.xlane.xlu0 %307
  %v309 = vsel %vm70, %v297, -inf
  %310 = vmax.xlane.f32.xlu0 %v309
  %v311 = vpop.xlane.xlu0 %310
  %v312 = vsel %vm70, %v298, -inf
  %313 = vmax.xlane.f32.xlu0 %v312
  %v314 = vpop.xlane.xlu0 %313
  %v315 = vsel %vm70, %v299, -inf
  %316 = vmax.xlane.f32.xlu0 %v315
  %v317 = vpop.xlane.xlu0 %316
  %v318 = vsel %vm70, %v300, -inf
  %319 = vmax.xlane.f32.xlu0 %v318
  %v320 = vpop.xlane.xlu0 %319
  %v321 = vsel %vm70, %v301, -inf
  %322 = vmax.xlane.f32.xlu0 %v321
  %v323 = vpop.xlane.xlu0 %322
  %v324 = vsel %vm70, %v302, -inf
  %325 = vmax.xlane.f32.xlu0 %v324
  %v326 = vpop.xlane.xlu0 %325
  %v327 = vsub.f32 %v295, %v305
  %v328 = vsub.f32 %v296, %v308
  %v329 = vsub.f32 %v297, %v311
  %v330 = vsub.f32 %v298, %v314
  %v331 = vsub.f32 %v299, %v317
  %v332 = vsub.f32 %v300, %v320
  %v333 = vsub.f32 %v301, %v323
  %v334 = vsub.f32 %v302, %v326
  %v335 = vmul.f32 %v327, 1.442695
  %v336 = vpow.pop %v335
  %v337 = vmul.f32 %v328, 1.442695
  %v338 = vpow.pop %v337
  %v339 = vmul.f32 %v329, 1.442695
  %v340 = vpow.pop %v339
  %v341 = vmul.f32 %v330, 1.442695
  %v342 = vpow.pop %v341
  %v343 = vmul.f32 %v331, 1.442695
  %v344 = vpow.pop %v343
  %v345 = vmul.f32 %v332, 1.442695
  %v346 = vpow.pop %v345
  %v347 = vmul.f32 %v333, 1.442695
  %v348 = vpow.pop %v347
  %v349 = vmul.f32 %v334, 1.442695
  %v350 = vpow.pop %v349
  %v351 = vsel %vm70, %v336, 0.0
  %352 = vadd.xlane.f32.xlu0 %v351
  %v353 = vpop.xlane.xlu0 %352
  %v354 = vsel %vm70, %v338, 0.0
  %355 = vadd.xlane.f32.xlu0 %v354
  %v356 = vpop.xlane.xlu0 %355
  %v357 = vsel %vm70, %v340, 0.0
  %358 = vadd.xlane.f32.xlu0 %v357
  %v359 = vpop.xlane.xlu0 %358
  %v360 = vsel %vm70, %v342, 0.0
  %361 = vadd.xlane.f32.xlu0 %v360
  %v362 = vpop.xlane.xlu0 %361
  %v363 = vsel %vm70, %v344, 0.0
  %364 = vadd.xlane.f32.xlu0 %v363
  %v365 = vpop.xlane.xlu0 %364
  %v366 = vsel %vm70, %v346, 0.0
  %367 = vadd.xlane.f32.xlu0 %v366
  %v368 = vpop.xlane.xlu0 %367
  %v369 = vsel %vm70, %v348, 0.0
  %370 = vadd.xlane.f32.xlu0 %v369
  %v371 = vpop.xlane.xlu0 %370
  %v372 = vsel %vm70, %v350, 0.0
  %373 = vadd.xlane.f32.xlu0 %v372
  %v374 = vpop.xlane.xlu0 %373
  %v375 = vrcp.pop %v353
  %v376 = vrcp.pop %v356
  %v377 = vrcp.pop %v359
  %v378 = vrcp.pop %v362
  %v379 = vrcp.pop %v365
  %v380 = vrcp.pop %v368
  %v381 = vrcp.pop %v371
  %v382 = vrcp.pop %v374
  %v383 = vmul.f32 %v336, %v375
  %v384 = vmul.f32 %v338, %v376
  %v385 = vmul.f32 %v340, %v377
  %v386 = vmul.f32 %v342, %v378
  %v387 = vmul.f32 %v344, %v379
  %v388 = vmul.f32 %v346, %v380
  %v389 = vmul.f32 %v348, %v381
  %v390 = vmul.f32 %v350, %v382
  %v391 = vpack.c.bf16 %v384, %v383
  %v392 = vpack.c.bf16 %v386, %v385
  %v393 = vpack.c.bf16 %v388, %v387
  %v394 = vpack.c.bf16 %v390, %v389
  %v396 = vsel %vm70, %v391, 0
  %v399 = vsel %vm70, %v392, 0
  %v402 = vsel %vm70, %v393, 0
  %v405 = vsel %vm70, %v394, 0
  %407 = vmatprep.subr.bf16.mxu0 0
  %408 = vmatpush1.bf16.msra.mxu0 %v115
  %409 = vmatprep.subr.bf16.mxu0 0
  %410 = vmatpush1.bf16.msra.mxu0 0
  %411 = vmatprep.subr.bf16.mxu0 0
  %412 = vmatpush1.bf16.msra.mxu0 0
  %413 = vmatprep.subr.bf16.mxu0 0
  %414 = vmatpush1.bf16.msra.mxu0 0
  %415 = vmatprep.subr.bf16.mxu0 0
  %416 = vmatpush1.bf16.msra.mxu0 0
  %417 = vmatprep.subr.bf16.mxu0 0
  %418 = vmatpush1.bf16.msra.mxu0 0
  %419 = vmatprep.subr.bf16.mxu0 0
  %420 = vmatpush1.bf16.msra.mxu0 0
  %421 = vmatprep.subr.bf16.mxu0 0
  %422 = vmatpush1.bf16.msra.mxu0 0
  %423 = vmatprep.subr.bf16.mxu0 0
  %424 = vmatpush1.bf16.msra.mxu0 0
  %425 = vmatprep.subr.bf16.mxu0 0
  %426 = vmatpush1.bf16.msra.mxu0 0
  %427 = vmatprep.subr.bf16.mxu0 0
  %428 = vmatpush1.bf16.msra.mxu0 0
  %429 = vmatprep.subr.bf16.mxu0 0
  %430 = vmatpush1.bf16.msra.mxu0 0
  %431 = vmatprep.subr.bf16.mxu0 0
  %432 = vmatpush1.bf16.msra.mxu0 0
  %433 = vmatprep.subr.bf16.mxu0 0
  %434 = vmatpush1.bf16.msra.mxu0 0
  %435 = vmatprep.subr.bf16.mxu0 0
  %436 = vmatpush1.bf16.msra.mxu0 0
  %437 = vmatprep.subr.bf16.mxu0 0
  %438 = vmatpush1.bf16.msra.mxu0 0
  %439 = vmatprep.mubr.bf16.mxu0 0
  %440 = vmatmul.mubr.bf16.gmra.mrb[0].mxu0 %v396
  %v441 = vpop.f32.mrb[0].mxu0
  %v442 = vadd.f32 0.0, %v441
  %v443 = vpop.f32.mrb[0].mxu0
  %v444 = vpop.f32.mrb[0].mxu0
  %v445 = vadd.f32 0.0, %v444
  %v446 = vpop.f32.mrb[0].mxu0
  %447 = vmatprep.mubr.bf16.mxu0 0
  %448 = vmatmul.mubr.bf16.gmra.mrb[0].mxu0 %v399
  %v449 = vpop.f32.mrb[0].mxu0
  %v450 = vadd.f32 0.0, %v449
  %v451 = vpop.f32.mrb[0].mxu0
  %v452 = vpop.f32.mrb[0].mxu0
  %v453 = vadd.f32 0.0, %v452
  %v454 = vpop.f32.mrb[0].mxu0
  %455 = vmatprep.mubr.bf16.mxu0 0
  %456 = vmatmul.mubr.bf16.gmra.mrb[0].mxu0 %v402
  %v457 = vpop.f32.mrb[0].mxu0
  %v458 = vadd.f32 0.0, %v457
  %v459 = vpop.f32.mrb[0].mxu0
  %v460 = vpop.f32.mrb[0].mxu0
  %v461 = vadd.f32 0.0, %v460
  %v462 = vpop.f32.mrb[0].mxu0
  %463 = vmatprep.mubr.bf16.mxu0 0
  %464 = vmatmul.mubr.bf16.gmra.mrb[0].mxu0 %v405
  %v465 = vpop.f32.mrb[0].mxu0
  %v466 = vadd.f32 0.0, %v465
  %v467 = vpop.f32.mrb[0].mxu0
  %v468 = vpop.f32.mrb[0].mxu0
  %v469 = vadd.f32 0.0, %v468
  %v470 = vpop.f32.mrb[0].mxu0
  %471 = vdwg.mxu0
  %vm472 = vcmask 64512
  %v473 = vsel %vm472, %v442, %v450
  %v474 = vsel %vm472, %v445, %v453
  %v475 = vsel %vm70, %v473, %v458
  %v476 = vsel %vm70, %v474, %v461
  %vm477 = vcmask 195584
  %v478 = vsel %vm477, %v475, %v466
  %v479 = vsel %vm477, %v476, %v469
  %v480 = vlaneseq
  %v481 = vshrl.u32 %v480, 7
  %v482 = vsub.s32 0, %v481
  %v483 = vrot.slane %v60, %v482
  %v484 = vadd.f32 %v478, %v483
  %v485 = vadd.f32 %v479, %v483
  %v486 = vld [vmem:[%s12 + $0x1] sm:$0x1]
  %v487 = vld [vmem:[%s12 + $0x2] sm:$0x1]
  %v488 = vlaneseq
  %v489 = vshrl.u32 %v488, 7
  %v490 = vsub.s32 0, %v489
  %v491 = vrot.slane %v486, %v490
  %v492 = vmul.f32 %v484, %v491
  %v493 = vmul.f32 %v485, %v491
  %v494 = vlaneseq
  %v495 = vshrl.u32 %v494, 7
  %v496 = vsub.s32 0, %v495
  %v497 = vrot.slane %v487, %v496
  %v498 = vadd.f32 %v492, %v497
  %v499 = vadd.f32 %v493, %v497
  %vm500 = vcmp.gt.f32.partialorder %v498, 0.0
  %vm501 = vcmp.gt.f32.partialorder %v499, 0.0
  %v502 = vmin.f32 %v498, 0.0
  %v503 = vmin.f32 %v499, 0.0
  %v504 = vmul.f32 %v502, 1.442695
  %v505 = vpow.pop %v504
  %v506 = vmul.f32 %v503, 1.442695
  %v507 = vpow.pop %v506
  %v508 = vsub.f32 %v505, 1.0
  %v509 = vsub.f32 %v507, 1.0
  %v510 = vsel %vm500, %v498, %v508
  %v511 = vsel %vm501, %v499, %v509
  %v512 = vld [vmem:[%s12 + $0x3] sm:$0x1]
  %v513 = vpack.c.bf16 %v511, %v510
  %v514 = vld [vmem:[%s5] sm:$0xf]
  %v515 = vld [vmem:[%s5 + $0x4] sm:$0xf]
  %v516 = vld [vmem:[%s5 + $0x8] sm:$0xf]
  %v517 = vld [vmem:[%s5 + $0xc] sm:$0xf]
  %v522 = vunpack.c.l.b16 %v514
  %v523 = vunpack.c.l.b16 %v515
  %v524 = vunpack.c.l.b16 %v516
  %v525 = vunpack.c.l.b16 %v517
  %v526 = vpack.c.b16 %v523, %v522
  %v527 = vpack.c.b16 %v525, %v524
  %v531 = vsel %vm132, %v513, 0
  %533 = vmatprep.subr.bf16.mxu0 0
  %534 = vmatpush1.bf16.msra.mxu0 %v526
  %535 = vmatprep.subr.bf16.mxu0 0
  %536 = vmatpush1.bf16.msra.mxu0 %v527
  %537 = vmatprep.subr.bf16.mxu0 0
  %538 = vmatpush1.bf16.msra.mxu0 0
  %539 = vmatprep.subr.bf16.mxu0 0
  %540 = vmatpush1.bf16.msra.mxu0 0
  %541 = vmatprep.subr.bf16.mxu0 0
  %542 = vmatpush1.bf16.msra.mxu0 0
  %543 = vmatprep.subr.bf16.mxu0 0
  %544 = vmatpush1.bf16.msra.mxu0 0
  %545 = vmatprep.subr.bf16.mxu0 0
  %546 = vmatpush1.bf16.msra.mxu0 0
  %547 = vmatprep.subr.bf16.mxu0 0
  %548 = vmatpush1.bf16.msra.mxu0 0
  %549 = vmatprep.subr.bf16.mxu0 0
  %550 = vmatpush1.bf16.msra.mxu0 0
  %551 = vmatprep.subr.bf16.mxu0 0
  %552 = vmatpush1.bf16.msra.mxu0 0
  %553 = vmatprep.subr.bf16.mxu0 0
  %554 = vmatpush1.bf16.msra.mxu0 0
  %555 = vmatprep.subr.bf16.mxu0 0
  %556 = vmatpush1.bf16.msra.mxu0 0
  %557 = vmatprep.subr.bf16.mxu0 0
  %558 = vmatpush1.bf16.msra.mxu0 0
  %559 = vmatprep.subr.bf16.mxu0 0
  %560 = vmatpush1.bf16.msra.mxu0 0
  %561 = vmatprep.subr.bf16.mxu0 0
  %562 = vmatpush1.bf16.msra.mxu0 0
  %563 = vmatprep.subr.bf16.mxu0 0
  %564 = vmatpush1.bf16.msra.mxu0 0
  %565 = vmatprep.mubr.bf16.mxu0 0
  %566 = vmatmul.mubr.bf16.gmra.mrb[0].mxu0 %v531
  %v567 = vpop.f32.mrb[0].mxu0
  %v568 = vadd.f32 0.0, %v567
  %v569 = vpop.f32.mrb[0].mxu0
  %v570 = vpop.f32.mrb[0].mxu0
  %v571 = vadd.f32 0.0, %v570
  %v572 = vpop.f32.mrb[0].mxu0
  %573 = vdwg.mxu0
  %v574 = vpack.c.bf16 %v571, %v568
  %v575 = vld [vmem:[%s6] sm:$0xf]
  %v576 = vld [vmem:[%s6 + $0x4] sm:$0xf]
  %v579 = vunpack.c.l.b16 %v575
  %v580 = vunpack.c.l.b16 %v576
  %v581 = vpack.c.b16 %v580, %v579
  %v584 = vsel %vm70, %v574, 0
  %586 = vmatprep.subr.bf16.mxu0 0
  %587 = vmatpush1.bf16.msra.mxu0 %v581
  %588 = vmatprep.subr.bf16.mxu0 0
  %589 = vmatpush1.bf16.msra.mxu0 0
  %590 = vmatprep.subr.bf16.mxu0 0
  %591 = vmatpush1.bf16.msra.mxu0 0
  %592 = vmatprep.subr.bf16.mxu0 0
  %593 = vmatpush1.bf16.msra.mxu0 0
  %594 = vmatprep.subr.bf16.mxu0 0
  %595 = vmatpush1.bf16.msra.mxu0 0
  %596 = vmatprep.subr.bf16.mxu0 0
  %597 = vmatpush1.bf16.msra.mxu0 0
  %598 = vmatprep.subr.bf16.mxu0 0
  %599 = vmatpush1.bf16.msra.mxu0 0
  %600 = vmatprep.subr.bf16.mxu0 0
  %601 = vmatpush1.bf16.msra.mxu0 0
  %602 = vmatprep.subr.bf16.mxu0 0
  %603 = vmatpush1.bf16.msra.mxu0 0
  %604 = vmatprep.subr.bf16.mxu0 0
  %605 = vmatpush1.bf16.msra.mxu0 0
  %606 = vmatprep.subr.bf16.mxu0 0
  %607 = vmatpush1.bf16.msra.mxu0 0
  %608 = vmatprep.subr.bf16.mxu0 0
  %609 = vmatpush1.bf16.msra.mxu0 0
  %610 = vmatprep.subr.bf16.mxu0 0
  %611 = vmatpush1.bf16.msra.mxu0 0
  %612 = vmatprep.subr.bf16.mxu0 0
  %613 = vmatpush1.bf16.msra.mxu0 0
  %614 = vmatprep.subr.bf16.mxu0 0
  %615 = vmatpush1.bf16.msra.mxu0 0
  %616 = vmatprep.subr.bf16.mxu0 0
  %617 = vmatpush1.bf16.msra.mxu0 0
  %618 = vmatprep.mubr.bf16.mxu0 0
  %619 = vmatmul.mubr.bf16.gmra.mrb[0].mxu0 %v584
  %v620 = vpop.f32.mrb[0].mxu0
  %v621 = vadd.f32 0.0, %v620
  %v622 = vpop.f32.mrb[0].mxu0
  %v623 = vpop.f32.mrb[0].mxu0
  %v624 = vadd.f32 0.0, %v623
  %v625 = vpop.f32.mrb[0].mxu0
  %626 = vdwg.mxu0
  %627 = vxpose.xlu0.b32.start [1/16] %v621, 128
  %628 = vxpose.xlu0.b32.cont [2/16] %v624, 128
  %629 = vxpose.xlu0.b32.cont [3/16] 0.0, 128
  %630 = vxpose.xlu0.b32.cont [4/16] 0.0, 128
  %631 = vxpose.xlu0.b32.cont [5/16] 0.0, 128
  %632 = vxpose.xlu0.b32.cont [6/16] 0.0, 128
  %633 = vxpose.xlu0.b32.cont [7/16] 0.0, 128
  %634 = vxpose.xlu0.b32.cont [8/16] 0.0, 128
  %635 = vxpose.xlu0.b32.cont [9/16] 0.0, 128
  %636 = vxpose.xlu0.b32.cont [10/16] 0.0, 128
  %637 = vxpose.xlu0.b32.cont [11/16] 0.0, 128
  %638 = vxpose.xlu0.b32.cont [12/16] 0.0, 128
  %639 = vxpose.xlu0.b32.cont [13/16] 0.0, 128
  %640 = vxpose.xlu0.b32.cont [14/16] 0.0, 128
  %641 = vxpose.xlu0.b32.cont [15/16] 0.0, 128
  %642 = vxpose.xlu0.b32.end [16/16] 0.0, 128
  %v643 = vpop.trf.xlu0
  %v644 = vpop.trf.xlu0
  %v645 = vpop.trf.xlu0
  %v646 = vpop.trf.xlu0
  %v647 = vpop.trf.xlu0
  %v648 = vpop.trf.xlu0
  %v649 = vpop.trf.xlu0
  %v650 = vpop.trf.xlu0
  %v651 = vpop.trf.xlu0
  %v652 = vpop.trf.xlu0
  %v653 = vpop.trf.xlu0
  %v654 = vpop.trf.xlu0
  %v655 = vpop.trf.xlu0
  %v656 = vpop.trf.xlu0
  %v657 = vpop.trf.xlu0
  %v658 = vpop.trf.xlu0
  %661 = vrot.lane.b32.xlu0 %v621, 127
  %v662 = vpop.permute.xlu0 %661
  %663 = vrot.lane.b32.xlu0 %v624, 127
  %v664 = vpop.permute.xlu0 %663
  %v665 = vlaneseq
  %v666 = vshrl.u32 %v665, 7
  %v667 = vsub.s32 0, %v666
  %v668 = vrot.slane %v643, %v667
  %v669 = vlaneseq
  %v670 = vshrl.u32 %v669, 7
  %v671 = vsub.s32 1, %v670
  %v672 = vrot.slane %v643, %v671
  %673 = vset.pattern.permute.xlu0 2
  %674 = vperm.xlu0 %673, %v621
  %v675 = vpop.permute.xlu0 %674
  %677 = vset.pattern.permute.xlu0 2
  %678 = vperm.xlu0 %677, %v624
  %v679 = vpop.permute.xlu0 %678
  %681 = vset.pattern.permute.xlu0 2
  %682 = vperm.xlu0 %681, %v662
  %v683 = vpop.permute.xlu0 %682
  %685 = vset.pattern.permute.xlu0 2
  %686 = vperm.xlu0 %685, %v664
  %v687 = vpop.permute.xlu0 %686
  %v689 = vadd.f32 %v675, %v668
  %v690 = vadd.f32 %v679, %v668
  %v691 = vadd.f32 %v683, %v672
  %v692 = vadd.f32 %v687, %v672
  %v693 = vmul.f32 %v689, 0.2
  %v694 = vmul.f32 %v690, 0.2
  %v695 = vmul.f32 %v691, 0.2
  %v696 = vmul.f32 %v692, 0.2
  %v697 = vmax.f32 %v689, %v693
  %v698 = vmax.f32 %v690, %v694
  %v699 = vmax.f32 %v691, %v695
  %v700 = vmax.f32 %v692, %v696
  %v701 = vadd.f32 %v697, %v56
  %v702 = vadd.f32 %v698, %v57
  %v703 = vadd.f32 %v699, %v56
  %v704 = vadd.f32 %v700, %v57
  %v705 = vsel %vm70, %v701, -inf
  %706 = vmax.xlane.f32.xlu0 %v705
  %v707 = vpop.xlane.xlu0 %706
  %v708 = vsel %vm70, %v702, -inf
  %709 = vmax.xlane.f32.xlu0 %v708
  %v710 = vpop.xlane.xlu0 %709
  %v711 = vsel %vm70, %v703, -inf
  %712 = vmax.xlane.f32.xlu0 %v711
  %v713 = vpop.xlane.xlu0 %712
  %v714 = vsel %vm70, %v704, -inf
  %715 = vmax.xlane.f32.xlu0 %v714
  %v716 = vpop.xlane.xlu0 %715
  %v717 = vsub.f32 %v701, %v707
  %v718 = vsub.f32 %v702, %v710
  %v719 = vsub.f32 %v703, %v713
  %v720 = vsub.f32 %v704, %v716
  %v721 = vmul.f32 %v717, 1.442695
  %v722 = vpow.pop %v721
  %v723 = vmul.f32 %v718, 1.442695
  %v724 = vpow.pop %v723
  %v725 = vmul.f32 %v719, 1.442695
  %v726 = vpow.pop %v725
  %v727 = vmul.f32 %v720, 1.442695
  %v728 = vpow.pop %v727
  %v729 = vsel %vm70, %v722, 0.0
  %730 = vadd.xlane.f32.xlu0 %v729
  %v731 = vpop.xlane.xlu0 %730
  %v732 = vsel %vm70, %v724, 0.0
  %733 = vadd.xlane.f32.xlu0 %v732
  %v734 = vpop.xlane.xlu0 %733
  %v735 = vsel %vm70, %v726, 0.0
  %736 = vadd.xlane.f32.xlu0 %v735
  %v737 = vpop.xlane.xlu0 %736
  %v738 = vsel %vm70, %v728, 0.0
  %739 = vadd.xlane.f32.xlu0 %v738
  %v740 = vpop.xlane.xlu0 %739
  %v741 = vrcp.pop %v731
  %v742 = vrcp.pop %v734
  %v743 = vrcp.pop %v737
  %v744 = vrcp.pop %v740
  %v745 = vmul.f32 %v722, %v741
  %v746 = vmul.f32 %v724, %v742
  %v747 = vmul.f32 %v726, %v743
  %v748 = vmul.f32 %v728, %v744
  %v749 = vpack.c.bf16 %v746, %v745
  %v750 = vpack.c.bf16 %v748, %v747
  %v752 = vsel %vm70, %v749, 0
  %v755 = vsel %vm70, %v750, 0
  %757 = vmatprep.subr.bf16.mxu0 0
  %758 = vmatpush1.bf16.msra.mxu0 %v574
  %759 = vmatprep.subr.bf16.mxu0 0
  %760 = vmatpush1.bf16.msra.mxu0 0
  %761 = vmatprep.subr.bf16.mxu0 0
  %762 = vmatpush1.bf16.msra.mxu0 0
  %763 = vmatprep.subr.bf16.mxu0 0
  %764 = vmatpush1.bf16.msra.mxu0 0
  %765 = vmatprep.subr.bf16.mxu0 0
  %766 = vmatpush1.bf16.msra.mxu0 0
  %767 = vmatprep.subr.bf16.mxu0 0
  %768 = vmatpush1.bf16.msra.mxu0 0
  %769 = vmatprep.subr.bf16.mxu0 0
  %770 = vmatpush1.bf16.msra.mxu0 0
  %771 = vmatprep.subr.bf16.mxu0 0
  %772 = vmatpush1.bf16.msra.mxu0 0
  %773 = vmatprep.subr.bf16.mxu0 0
  %774 = vmatpush1.bf16.msra.mxu0 0
  %775 = vmatprep.subr.bf16.mxu0 0
  %776 = vmatpush1.bf16.msra.mxu0 0
  %777 = vmatprep.subr.bf16.mxu0 0
  %778 = vmatpush1.bf16.msra.mxu0 0
  %779 = vmatprep.subr.bf16.mxu0 0
  %780 = vmatpush1.bf16.msra.mxu0 0
  %781 = vmatprep.subr.bf16.mxu0 0
  %782 = vmatpush1.bf16.msra.mxu0 0
  %783 = vmatprep.subr.bf16.mxu0 0
  %784 = vmatpush1.bf16.msra.mxu0 0
  %785 = vmatprep.subr.bf16.mxu0 0
  %786 = vmatpush1.bf16.msra.mxu0 0
  %787 = vmatprep.subr.bf16.mxu0 0
  %788 = vmatpush1.bf16.msra.mxu0 0
  %789 = vmatprep.mubr.bf16.mxu0 0
  %790 = vmatmul.mubr.bf16.gmra.mrb[0].mxu0 %v752
  %v791 = vpop.f32.mrb[0].mxu0
  %v792 = vadd.f32 0.0, %v791
  %v793 = vpop.f32.mrb[0].mxu0
  %v794 = vpop.f32.mrb[0].mxu0
  %v795 = vadd.f32 0.0, %v794
  %v796 = vpop.f32.mrb[0].mxu0
  %797 = vmatprep.mubr.bf16.mxu0 0
  %798 = vmatmul.mubr.bf16.gmra.mrb[0].mxu0 %v755
  %v799 = vpop.f32.mrb[0].mxu0
  %v800 = vadd.f32 0.0, %v799
  %v801 = vpop.f32.mrb[0].mxu0
  %v802 = vpop.f32.mrb[0].mxu0
  %v803 = vadd.f32 0.0, %v802
  %v804 = vpop.f32.mrb[0].mxu0
  %805 = vdwg.mxu0
  %v806 = vsel %vm472, %v792, %v800
  %v807 = vsel %vm472, %v795, %v803
  %v808 = vlaneseq
  %v809 = vshrl.u32 %v808, 7
  %v810 = vsub.s32 0, %v809
  %v811 = vrot.slane %v512, %v810
  %v812 = vadd.f32 %v806, %v811
  %v813 = vadd.f32 %v807, %v811
  %v814 = vld [vmem:[%s12 + $0x4] sm:$0x1]
  %v815 = vld [vmem:[%s12 + $0x5] sm:$0x1]
  %v816 = vlaneseq
  %v817 = vshrl.u32 %v816, 7
  %v818 = vsub.s32 0, %v817
  %v819 = vrot.slane %v814, %v818
  %v820 = vmul.f32 %v812, %v819
  %v821 = vmul.f32 %v813, %v819
  %v822 = vlaneseq
  %v823 = vshrl.u32 %v822, 7
  %v824 = vsub.s32 0, %v823
  %v825 = vrot.slane %v815, %v824
  %v826 = vadd.f32 %v820, %v825
  %v827 = vadd.f32 %v821, %v825
  %vm828 = vcmp.gt.f32.partialorder %v826, 0.0
  %vm829 = vcmp.gt.f32.partialorder %v827, 0.0
  %v830 = vmin.f32 %v826, 0.0
  %v831 = vmin.f32 %v827, 0.0
  %v832 = vmul.f32 %v830, 1.442695
  %v833 = vpow.pop %v832
  %v834 = vmul.f32 %v831, 1.442695
  %v835 = vpow.pop %v834
  %v836 = vsub.f32 %v833, 1.0
  %v837 = vsub.f32 %v835, 1.0
  %v838 = vsel %vm828, %v826, %v836
  %v839 = vsel %vm829, %v827, %v837
  %v840 = vpack.c.bf16 %v839, %v838
  %v841 = vld [vmem:[%s7] sm:$0xf]
  %v842 = vld [vmem:[%s7 + $0x4] sm:$0xf]
  %v843 = vld [vmem:[%s12 + $0x6] sm:$0x1]
  %v844 = vlaneseq
  %v845 = vshrl.u32 %v844, 7
  %v846 = vsub.s32 0, %v845
  %v847 = vrot.slane %v843, %v846
  %v850 = vunpack.c.l.b16 %v841
  %v851 = vunpack.c.l.b16 %v842
  %v852 = vpack.c.b16 %v851, %v850
  %v855 = vsel %vm70, %v840, 0
  %857 = vmatprep.subr.bf16.mxu0 0
  %858 = vmatpush1.bf16.msra.mxu0 %v852
  %859 = vmatprep.subr.bf16.mxu0 0
  %860 = vmatpush1.bf16.msra.mxu0 0
  %861 = vmatprep.subr.bf16.mxu0 0
  %862 = vmatpush1.bf16.msra.mxu0 0
  %863 = vmatprep.subr.bf16.mxu0 0
  %864 = vmatpush1.bf16.msra.mxu0 0
  %865 = vmatprep.subr.bf16.mxu0 0
  %866 = vmatpush1.bf16.msra.mxu0 0
  %867 = vmatprep.subr.bf16.mxu0 0
  %868 = vmatpush1.bf16.msra.mxu0 0
  %869 = vmatprep.subr.bf16.mxu0 0
  %870 = vmatpush1.bf16.msra.mxu0 0
  %871 = vmatprep.subr.bf16.mxu0 0
  %872 = vmatpush1.bf16.msra.mxu0 0
  %873 = vmatprep.subr.bf16.mxu0 0
  %874 = vmatpush1.bf16.msra.mxu0 0
  %875 = vmatprep.subr.bf16.mxu0 0
  %876 = vmatpush1.bf16.msra.mxu0 0
  %877 = vmatprep.subr.bf16.mxu0 0
  %878 = vmatpush1.bf16.msra.mxu0 0
  %879 = vmatprep.subr.bf16.mxu0 0
  %880 = vmatpush1.bf16.msra.mxu0 0
  %881 = vmatprep.subr.bf16.mxu0 0
  %882 = vmatpush1.bf16.msra.mxu0 0
  %883 = vmatprep.subr.bf16.mxu0 0
  %884 = vmatpush1.bf16.msra.mxu0 0
  %885 = vmatprep.subr.bf16.mxu0 0
  %886 = vmatpush1.bf16.msra.mxu0 0
  %887 = vmatprep.subr.bf16.mxu0 0
  %888 = vmatpush1.bf16.msra.mxu0 0
  %889 = vmatprep.mubr.bf16.mxu0 0
  %890 = vmatmul.mubr.bf16.gmra.mrb[0].mxu0 %v855
  %v891 = vpop.f32.mrb[0].mxu0
  %v892 = vadd.f32 %v847, %v891
  %v893 = vpop.f32.mrb[0].mxu0
  %v894 = vpop.f32.mrb[0].mxu0
  %v895 = vadd.f32 %v847, %v894
  %v896 = vpop.f32.mrb[0].mxu0
  %897 = vdwg.mxu0
  %v898 = vld [vmem:[%s2] sm:$0xff]
  %v899 = vld [vmem:[%s2 + $0x8] sm:$0xff]
  %v900 = vld [vmem:[%s12 + $0x7] sm:$0x1]
  %902 = vset.pattern.permute.xlu0 0
  %903 = vperm.xlu0 %902, %v898
  %v904 = vpop.permute.xlu0 %903
  %907 = vset.pattern.permute.xlu0 0
  %908 = vperm.xlu0 %907, %v899
  %v909 = vpop.permute.xlu0 %908
  %v911 = vlaneseq
  %v912 = vshrl.u32 %v911, 7
  %v913 = vsub.s32 0, %v912
  %v914 = vrot.slane %v900, %v913
  %v915 = vmul.f32 %v904, %v914
  %v916 = vmul.f32 %v909, %v914
  %v917 = vsub.f32 1.0, %v898
  %v918 = vsub.f32 1.0, %v899
  %v919 = vld [vmem:[%s12 + $0x8] sm:$0x1]
  %921 = vset.pattern.permute.xlu0 0
  %922 = vperm.xlu0 %921, %v917
  %v923 = vpop.permute.xlu0 %922
  %926 = vset.pattern.permute.xlu0 0
  %927 = vperm.xlu0 %926, %v918
  %v928 = vpop.permute.xlu0 %927
  %v930 = vlaneseq
  %v931 = vshrl.u32 %v930, 7
  %v932 = vsub.s32 0, %v931
  %v933 = vrot.slane %v919, %v932
  %v934 = vmul.f32 %v923, %v933
  %v935 = vmul.f32 %v928, %v933
  %v936 = vadd.f32 %v915, %v934
  %v937 = vadd.f32 %v916, %v935
  %v938 = vpack.c.bf16 %v895, %v892
  %v939 = vpack.c.bf16 %v937, %v936
  %v940 = vld [vmem:[%s8] sm:$0xff]
  %v941 = vld [vmem:[%s8 + $0x8] sm:$0xff]
  %v942 = vld [vmem:[%s8 + $0x10] sm:$0xff]
  %v943 = vld [vmem:[%s8 + $0x18] sm:$0xff]
  %v944 = vld [vmem:[%s8 + $0x20] sm:$0xff]
  %v945 = vld [vmem:[%s8 + $0x28] sm:$0xff]
  %v946 = vld [vmem:[%s8 + $0x30] sm:$0xff]
  %v947 = vld [vmem:[%s8 + $0x38] sm:$0xff]
  %v948 = vld [vmem:[%s8 + $0x40] sm:$0xff]
  %v949 = vld [vmem:[%s8 + $0x48] sm:$0xff]
  %v950 = vld [vmem:[%s8 + $0x50] sm:$0xff]
  %v951 = vld [vmem:[%s8 + $0x58] sm:$0xff]
  %v952 = vld [vmem:[%s8 + $0x60] sm:$0xff]
  %v953 = vld [vmem:[%s8 + $0x68] sm:$0xff]
  %v954 = vld [vmem:[%s8 + $0x70] sm:$0xff]
  %v955 = vld [vmem:[%s8 + $0x78] sm:$0xff]
  %v956 = vld [vmem:[%s8 + $0x80] sm:$0xff]
  %v957 = vld [vmem:[%s8 + $0x88] sm:$0xff]
  %v958 = vld [vmem:[%s8 + $0x90] sm:$0xff]
  %v959 = vld [vmem:[%s8 + $0x98] sm:$0xff]
  %v960 = vld [vmem:[%s8 + $0xa0] sm:$0xff]
  %v961 = vld [vmem:[%s8 + $0xa8] sm:$0xff]
  %v962 = vld [vmem:[%s8 + $0xb0] sm:$0xff]
  %v963 = vld [vmem:[%s8 + $0xb8] sm:$0xff]
  %v964 = vld [vmem:[%s8 + $0xc0] sm:$0xff]
  %v965 = vld [vmem:[%s8 + $0xc8] sm:$0xff]
  %v966 = vld [vmem:[%s8 + $0xd0] sm:$0xff]
  %v967 = vld [vmem:[%s8 + $0xd8] sm:$0xff]
  %v968 = vld [vmem:[%s8 + $0xe0] sm:$0xff]
  %v969 = vld [vmem:[%s8 + $0xe8] sm:$0xff]
  %v970 = vld [vmem:[%s8 + $0xf0] sm:$0xff]
  %v971 = vld [vmem:[%s8 + $0xf8] sm:$0xff]
  %v972 = vld [vmem:[%s8 + $0x100] sm:$0xff]
  %v973 = vld [vmem:[%s8 + $0x108] sm:$0xff]
  %v974 = vld [vmem:[%s8 + $0x110] sm:$0xff]
  %v975 = vld [vmem:[%s8 + $0x118] sm:$0xff]
  %v976 = vld [vmem:[%s8 + $0x120] sm:$0xff]
  %v977 = vld [vmem:[%s8 + $0x128] sm:$0xff]
  %v978 = vld [vmem:[%s8 + $0x130] sm:$0xff]
  %v979 = vld [vmem:[%s8 + $0x138] sm:$0xff]
  %v980 = vld [vmem:[%s8 + $0x140] sm:$0xff]
  %v981 = vld [vmem:[%s8 + $0x148] sm:$0xff]
  %v982 = vld [vmem:[%s8 + $0x150] sm:$0xff]
  %v983 = vld [vmem:[%s8 + $0x158] sm:$0xff]
  %v984 = vld [vmem:[%s8 + $0x160] sm:$0xff]
  %v985 = vld [vmem:[%s8 + $0x168] sm:$0xff]
  %v986 = vld [vmem:[%s8 + $0x170] sm:$0xff]
  %v987 = vld [vmem:[%s8 + $0x178] sm:$0xff]
  %v988 = vld [vmem:[%s8 + $0x180] sm:$0xff]
  %v989 = vld [vmem:[%s8 + $0x188] sm:$0xff]
  %v990 = vld [vmem:[%s8 + $0x190] sm:$0xff]
  %v991 = vld [vmem:[%s8 + $0x198] sm:$0xff]
  %v992 = vld [vmem:[%s8 + $0x1a0] sm:$0xff]
  %v993 = vld [vmem:[%s8 + $0x1a8] sm:$0xff]
  %v994 = vld [vmem:[%s8 + $0x1b0] sm:$0xff]
  %v995 = vld [vmem:[%s8 + $0x1b8] sm:$0xff]
  %v996 = vld [vmem:[%s8 + $0x1c0] sm:$0xff]
  %v997 = vld [vmem:[%s8 + $0x1c8] sm:$0xff]
  %v998 = vld [vmem:[%s8 + $0x1d0] sm:$0xff]
  %v999 = vld [vmem:[%s8 + $0x1d8] sm:$0xff]
  %v1000 = vld [vmem:[%s8 + $0x1e0] sm:$0xff]
  %v1001 = vld [vmem:[%s8 + $0x1e8] sm:$0xff]
  %v1002 = vld [vmem:[%s8 + $0x1f0] sm:$0xff]
  %v1003 = vld [vmem:[%s8 + $0x1f8] sm:$0xff]
  %v1004 = vld [vmem:[%s13] ss:$8 sm:$0xf]
  %v1006 = vlaneseq
  %v1007 = vshrl.u32 %v1006, 7
  %v1008 = vsub.s32 0, %v1007
  %v1009 = vrot.slane %v1004, %v1008
  %v1010 = vlaneseq
  %v1011 = vshrl.u32 %v1010, 7
  %v1012 = vsub.s32 1, %v1011
  %v1013 = vrot.slane %v1004, %v1012
  %v1014 = vlaneseq
  %v1015 = vshrl.u32 %v1014, 7
  %v1016 = vsub.s32 2, %v1015
  %v1017 = vrot.slane %v1004, %v1016
  %v1018 = vlaneseq
  %v1019 = vshrl.u32 %v1018, 7
  %v1020 = vsub.s32 3, %v1019
  %v1021 = vrot.slane %v1004, %v1020
  %v1090 = vunpack.c.l.b16 %v940
  %v1091 = vunpack.c.h.b16 %v940
  %v1092 = vunpack.c.l.b16 %v941
  %v1093 = vunpack.c.h.b16 %v941
  %v1094 = vunpack.c.l.b16 %v942
  %v1095 = vunpack.c.h.b16 %v942
  %v1096 = vunpack.c.l.b16 %v943
  %v1097 = vunpack.c.h.b16 %v943
  %v1098 = vunpack.c.l.b16 %v944
  %v1099 = vunpack.c.h.b16 %v944
  %v1100 = vunpack.c.l.b16 %v945
  %v1101 = vunpack.c.h.b16 %v945
  %v1102 = vunpack.c.l.b16 %v946
  %v1103 = vunpack.c.h.b16 %v946
  %v1104 = vunpack.c.l.b16 %v947
  %v1105 = vunpack.c.h.b16 %v947
  %v1106 = vunpack.c.l.b16 %v948
  %v1107 = vunpack.c.h.b16 %v948
  %v1108 = vunpack.c.l.b16 %v949
  %v1109 = vunpack.c.h.b16 %v949
  %v1110 = vunpack.c.l.b16 %v950
  %v1111 = vunpack.c.h.b16 %v950
  %v1112 = vunpack.c.l.b16 %v951
  %v1113 = vunpack.c.h.b16 %v951
  %v1114 = vunpack.c.l.b16 %v952
  %v1115 = vunpack.c.h.b16 %v952
  %v1116 = vunpack.c.l.b16 %v953
  %v1117 = vunpack.c.h.b16 %v953
  %v1118 = vunpack.c.l.b16 %v954
  %v1119 = vunpack.c.h.b16 %v954
  %v1120 = vunpack.c.l.b16 %v955
  %v1121 = vunpack.c.h.b16 %v955
  %v1122 = vunpack.c.l.b16 %v956
  %v1123 = vunpack.c.h.b16 %v956
  %v1124 = vunpack.c.l.b16 %v957
  %v1125 = vunpack.c.h.b16 %v957
  %v1126 = vunpack.c.l.b16 %v958
  %v1127 = vunpack.c.h.b16 %v958
  %v1128 = vunpack.c.l.b16 %v959
  %v1129 = vunpack.c.h.b16 %v959
  %v1130 = vunpack.c.l.b16 %v960
  %v1131 = vunpack.c.h.b16 %v960
  %v1132 = vunpack.c.l.b16 %v961
  %v1133 = vunpack.c.h.b16 %v961
  %v1134 = vunpack.c.l.b16 %v962
  %v1135 = vunpack.c.h.b16 %v962
  %v1136 = vunpack.c.l.b16 %v963
  %v1137 = vunpack.c.h.b16 %v963
  %v1138 = vunpack.c.l.b16 %v964
  %v1139 = vunpack.c.h.b16 %v964
  %v1140 = vunpack.c.l.b16 %v965
  %v1141 = vunpack.c.h.b16 %v965
  %v1142 = vunpack.c.l.b16 %v966
  %v1143 = vunpack.c.h.b16 %v966
  %v1144 = vunpack.c.l.b16 %v967
  %v1145 = vunpack.c.h.b16 %v967
  %v1146 = vunpack.c.l.b16 %v968
  %v1147 = vunpack.c.h.b16 %v968
  %v1148 = vunpack.c.l.b16 %v969
  %v1149 = vunpack.c.h.b16 %v969
  %v1150 = vunpack.c.l.b16 %v970
  %v1151 = vunpack.c.h.b16 %v970
  %v1152 = vunpack.c.l.b16 %v971
  %v1153 = vunpack.c.h.b16 %v971
  %v1154 = vunpack.c.l.b16 %v972
  %v1155 = vunpack.c.h.b16 %v972
  %v1156 = vunpack.c.l.b16 %v973
  %v1157 = vunpack.c.h.b16 %v973
  %v1158 = vunpack.c.l.b16 %v974
  %v1159 = vunpack.c.h.b16 %v974
  %v1160 = vunpack.c.l.b16 %v975
  %v1161 = vunpack.c.h.b16 %v975
  %v1162 = vunpack.c.l.b16 %v976
  %v1163 = vunpack.c.h.b16 %v976
  %v1164 = vunpack.c.l.b16 %v977
  %v1165 = vunpack.c.h.b16 %v977
  %v1166 = vunpack.c.l.b16 %v978
  %v1167 = vunpack.c.h.b16 %v978
  %v1168 = vunpack.c.l.b16 %v979
  %v1169 = vunpack.c.h.b16 %v979
  %v1170 = vunpack.c.l.b16 %v980
  %v1171 = vunpack.c.h.b16 %v980
  %v1172 = vunpack.c.l.b16 %v981
  %v1173 = vunpack.c.h.b16 %v981
  %v1174 = vunpack.c.l.b16 %v982
  %v1175 = vunpack.c.h.b16 %v982
  %v1176 = vunpack.c.l.b16 %v983
  %v1177 = vunpack.c.h.b16 %v983
  %v1178 = vunpack.c.l.b16 %v984
  %v1179 = vunpack.c.h.b16 %v984
  %v1180 = vunpack.c.l.b16 %v985
  %v1181 = vunpack.c.h.b16 %v985
  %v1182 = vunpack.c.l.b16 %v986
  %v1183 = vunpack.c.h.b16 %v986
  %v1184 = vunpack.c.l.b16 %v987
  %v1185 = vunpack.c.h.b16 %v987
  %v1186 = vunpack.c.l.b16 %v988
  %v1187 = vunpack.c.h.b16 %v988
  %v1188 = vunpack.c.l.b16 %v989
  %v1189 = vunpack.c.h.b16 %v989
  %v1190 = vunpack.c.l.b16 %v990
  %v1191 = vunpack.c.h.b16 %v990
  %v1192 = vunpack.c.l.b16 %v991
  %v1193 = vunpack.c.h.b16 %v991
  %v1194 = vunpack.c.l.b16 %v992
  %v1195 = vunpack.c.h.b16 %v992
  %v1196 = vunpack.c.l.b16 %v993
  %v1197 = vunpack.c.h.b16 %v993
  %v1198 = vunpack.c.l.b16 %v994
  %v1199 = vunpack.c.h.b16 %v994
  %v1200 = vunpack.c.l.b16 %v995
  %v1201 = vunpack.c.h.b16 %v995
  %v1202 = vunpack.c.l.b16 %v996
  %v1203 = vunpack.c.h.b16 %v996
  %v1204 = vunpack.c.l.b16 %v997
  %v1205 = vunpack.c.h.b16 %v997
  %v1206 = vunpack.c.l.b16 %v998
  %v1207 = vunpack.c.h.b16 %v998
  %v1208 = vunpack.c.l.b16 %v999
  %v1209 = vunpack.c.h.b16 %v999
  %v1210 = vunpack.c.l.b16 %v1000
  %v1211 = vunpack.c.h.b16 %v1000
  %v1212 = vunpack.c.l.b16 %v1001
  %v1213 = vunpack.c.h.b16 %v1001
  %v1214 = vunpack.c.l.b16 %v1002
  %v1215 = vunpack.c.h.b16 %v1002
  %v1216 = vunpack.c.l.b16 %v1003
  %v1217 = vunpack.c.h.b16 %v1003
  %v1218 = vpack.c.b16 %v1094, %v1090
  %v1219 = vpack.c.b16 %v1095, %v1091
  %v1220 = vpack.c.b16 %v1096, %v1092
  %v1221 = vpack.c.b16 %v1097, %v1093
  %v1222 = vpack.c.b16 %v1102, %v1098
  %v1223 = vpack.c.b16 %v1103, %v1099
  %v1224 = vpack.c.b16 %v1104, %v1100
  %v1225 = vpack.c.b16 %v1105, %v1101
  %v1226 = vpack.c.b16 %v1110, %v1106
  %v1227 = vpack.c.b16 %v1111, %v1107
  %v1228 = vpack.c.b16 %v1112, %v1108
  %v1229 = vpack.c.b16 %v1113, %v1109
  %v1230 = vpack.c.b16 %v1118, %v1114
  %v1231 = vpack.c.b16 %v1119, %v1115
  %v1232 = vpack.c.b16 %v1120, %v1116
  %v1233 = vpack.c.b16 %v1121, %v1117
  %v1234 = vpack.c.b16 %v1126, %v1122
  %v1235 = vpack.c.b16 %v1127, %v1123
  %v1236 = vpack.c.b16 %v1128, %v1124
  %v1237 = vpack.c.b16 %v1129, %v1125
  %v1238 = vpack.c.b16 %v1134, %v1130
  %v1239 = vpack.c.b16 %v1135, %v1131
  %v1240 = vpack.c.b16 %v1136, %v1132
  %v1241 = vpack.c.b16 %v1137, %v1133
  %v1242 = vpack.c.b16 %v1142, %v1138
  %v1243 = vpack.c.b16 %v1143, %v1139
  %v1244 = vpack.c.b16 %v1144, %v1140
  %v1245 = vpack.c.b16 %v1145, %v1141
  %v1246 = vpack.c.b16 %v1150, %v1146
  %v1247 = vpack.c.b16 %v1151, %v1147
  %v1248 = vpack.c.b16 %v1152, %v1148
  %v1249 = vpack.c.b16 %v1153, %v1149
  %v1250 = vpack.c.b16 %v1158, %v1154
  %v1251 = vpack.c.b16 %v1159, %v1155
  %v1252 = vpack.c.b16 %v1160, %v1156
  %v1253 = vpack.c.b16 %v1161, %v1157
  %v1254 = vpack.c.b16 %v1166, %v1162
  %v1255 = vpack.c.b16 %v1167, %v1163
  %v1256 = vpack.c.b16 %v1168, %v1164
  %v1257 = vpack.c.b16 %v1169, %v1165
  %v1258 = vpack.c.b16 %v1174, %v1170
  %v1259 = vpack.c.b16 %v1175, %v1171
  %v1260 = vpack.c.b16 %v1176, %v1172
  %v1261 = vpack.c.b16 %v1177, %v1173
  %v1262 = vpack.c.b16 %v1182, %v1178
  %v1263 = vpack.c.b16 %v1183, %v1179
  %v1264 = vpack.c.b16 %v1184, %v1180
  %v1265 = vpack.c.b16 %v1185, %v1181
  %v1266 = vpack.c.b16 %v1190, %v1186
  %v1267 = vpack.c.b16 %v1191, %v1187
  %v1268 = vpack.c.b16 %v1192, %v1188
  %v1269 = vpack.c.b16 %v1193, %v1189
  %v1270 = vpack.c.b16 %v1198, %v1194
  %v1271 = vpack.c.b16 %v1199, %v1195
  %v1272 = vpack.c.b16 %v1200, %v1196
  %v1273 = vpack.c.b16 %v1201, %v1197
  %v1274 = vpack.c.b16 %v1206, %v1202
  %v1275 = vpack.c.b16 %v1207, %v1203
  %v1276 = vpack.c.b16 %v1208, %v1204
  %v1277 = vpack.c.b16 %v1209, %v1205
  %v1278 = vpack.c.b16 %v1214, %v1210
  %v1279 = vpack.c.b16 %v1215, %v1211
  %v1280 = vpack.c.b16 %v1216, %v1212
  %v1281 = vpack.c.b16 %v1217, %v1213
  %1346 = vmatprep.subr.bf16.mxu0 %v1219
  %1347 = vmatpush1.bf16.msra.mxu0 %v1218
  %1348 = vmatprep.subr.bf16.mxu0 %v1223
  %1349 = vmatpush1.bf16.msra.mxu0 %v1222
  %1350 = vmatprep.subr.bf16.mxu0 %v1227
  %1351 = vmatpush1.bf16.msra.mxu0 %v1226
  %1352 = vmatprep.subr.bf16.mxu0 %v1231
  %1353 = vmatpush1.bf16.msra.mxu0 %v1230
  %1354 = vmatprep.subr.bf16.mxu0 %v1235
  %1355 = vmatpush1.bf16.msra.mxu0 %v1234
  %1356 = vmatprep.subr.bf16.mxu0 %v1239
  %1357 = vmatpush1.bf16.msra.mxu0 %v1238
  %1358 = vmatprep.subr.bf16.mxu0 %v1243
  %1359 = vmatpush1.bf16.msra.mxu0 %v1242
  %1360 = vmatprep.subr.bf16.mxu0 %v1247
  %1361 = vmatpush1.bf16.msra.mxu0 %v1246
  %1362 = vmatprep.subr.bf16.mxu0 %v1251
  %1363 = vmatpush1.bf16.msra.mxu0 %v1250
  %1364 = vmatprep.subr.bf16.mxu0 %v1255
  %1365 = vmatpush1.bf16.msra.mxu0 %v1254
  %1366 = vmatprep.subr.bf16.mxu0 %v1259
  %1367 = vmatpush1.bf16.msra.mxu0 %v1258
  %1368 = vmatprep.subr.bf16.mxu0 %v1263
  %1369 = vmatpush1.bf16.msra.mxu0 %v1262
  %1370 = vmatprep.subr.bf16.mxu0 %v1267
  %1371 = vmatpush1.bf16.msra.mxu0 %v1266
  %1372 = vmatprep.subr.bf16.mxu0 %v1271
  %1373 = vmatpush1.bf16.msra.mxu0 %v1270
  %1374 = vmatprep.subr.bf16.mxu0 %v1275
  %1375 = vmatpush1.bf16.msra.mxu0 %v1274
  %1376 = vmatprep.subr.bf16.mxu0 %v1279
  %1377 = vmatpush1.bf16.msra.mxu0 %v1278
  %1378 = vmatprep.mubr.bf16.mxu0 %v939
  %1379 = vmatmul.mubr.bf16.gmra.mrb[0].mxu0 %v938
  %v1380 = vpop.f32.mrb[0].mxu0
  %v1381 = vadd.f32 %v1009, %v1380
  %v1382 = vpop.f32.mrb[0].mxu0
  %v1383 = vadd.f32 %v1013, %v1382
  %v1384 = vpop.f32.mrb[0].mxu0
  %v1385 = vadd.f32 %v1009, %v1384
  %v1386 = vpop.f32.mrb[0].mxu0
  %v1387 = vadd.f32 %v1013, %v1386
  %1388 = vdwg.mxu0
  %1389 = vmatprep.subr.bf16.mxu0 %v1221
  %1390 = vmatpush1.bf16.msra.mxu0 %v1220
  %1391 = vmatprep.subr.bf16.mxu0 %v1225
  %1392 = vmatpush1.bf16.msra.mxu0 %v1224
  %1393 = vmatprep.subr.bf16.mxu0 %v1229
  %1394 = vmatpush1.bf16.msra.mxu0 %v1228
  %1395 = vmatprep.subr.bf16.mxu0 %v1233
  %1396 = vmatpush1.bf16.msra.mxu0 %v1232
  %1397 = vmatprep.subr.bf16.mxu0 %v1237
  %1398 = vmatpush1.bf16.msra.mxu0 %v1236
  %1399 = vmatprep.subr.bf16.mxu0 %v1241
  %1400 = vmatpush1.bf16.msra.mxu0 %v1240
  %1401 = vmatprep.subr.bf16.mxu0 %v1245
  %1402 = vmatpush1.bf16.msra.mxu0 %v1244
  %1403 = vmatprep.subr.bf16.mxu0 %v1249
  %1404 = vmatpush1.bf16.msra.mxu0 %v1248
  %1405 = vmatprep.subr.bf16.mxu0 %v1253
  %1406 = vmatpush1.bf16.msra.mxu0 %v1252
  %1407 = vmatprep.subr.bf16.mxu0 %v1257
  %1408 = vmatpush1.bf16.msra.mxu0 %v1256
  %1409 = vmatprep.subr.bf16.mxu0 %v1261
  %1410 = vmatpush1.bf16.msra.mxu0 %v1260
  %1411 = vmatprep.subr.bf16.mxu0 %v1265
  %1412 = vmatpush1.bf16.msra.mxu0 %v1264
  %1413 = vmatprep.subr.bf16.mxu0 %v1269
  %1414 = vmatpush1.bf16.msra.mxu0 %v1268
  %1415 = vmatprep.subr.bf16.mxu0 %v1273
  %1416 = vmatpush1.bf16.msra.mxu0 %v1272
  %1417 = vmatprep.subr.bf16.mxu0 %v1277
  %1418 = vmatpush1.bf16.msra.mxu0 %v1276
  %1419 = vmatprep.subr.bf16.mxu0 %v1281
  %1420 = vmatpush1.bf16.msra.mxu0 %v1280
  %1421 = vmatprep.mubr.bf16.mxu0 %v939
  %1422 = vmatmul.mubr.bf16.gmra.mrb[0].mxu0 %v938
  %v1423 = vpop.f32.mrb[0].mxu0
  %v1424 = vadd.f32 %v1017, %v1423
  %v1425 = vpop.f32.mrb[0].mxu0
  %v1426 = vadd.f32 %v1021, %v1425
  %v1427 = vpop.f32.mrb[0].mxu0
  %v1428 = vadd.f32 %v1017, %v1427
  %v1429 = vpop.f32.mrb[0].mxu0
  %v1430 = vadd.f32 %v1021, %v1429
  %1431 = vdwg.mxu0
  %s1432 = scalar_lea.vmem %s13, 1
  %v1433 = vld [vmem:[%s1432] ss:$8 sm:$0xf]
  %s1434 = scalar_lea.vmem %s13, 2
  %v1435 = vld [vmem:[%s1434] ss:$8 sm:$0xf]
  %v1436 = vadd.f32 %v1381, %v1383
  %v1437 = vadd.f32 %v1436, %v1424
  %v1438 = vadd.f32 %v1437, %v1426
  %1439 = vadd.xlane.f32.xlu0 %v1438
  %v1440 = vpop.xlane.xlu0 %1439
  %v1441 = vadd.f32 %v1385, %v1387
  %v1442 = vadd.f32 %v1441, %v1428
  %v1443 = vadd.f32 %v1442, %v1430
  %1444 = vadd.xlane.f32.xlu0 %v1443
  %v1445 = vpop.xlane.xlu0 %1444
  %v1446 = vrcp.pop 512.0
  %v1447 = vmul.f32 %v1440, %v1446
  %v1448 = vmul.f32 %v1445, %v1446
  %v1449 = vsub.f32 %v1381, %v1447
  %v1450 = vsub.f32 %v1383, %v1447
  %v1451 = vsub.f32 %v1424, %v1447
  %v1452 = vsub.f32 %v1426, %v1447
  %v1453 = vsub.f32 %v1385, %v1448
  %v1454 = vsub.f32 %v1387, %v1448
  %v1455 = vsub.f32 %v1428, %v1448
  %v1456 = vsub.f32 %v1430, %v1448
  %v1457 = vmul.f32 %v1449, %v1449
  %v1458 = vmul.f32 %v1450, %v1450
  %v1459 = vmul.f32 %v1451, %v1451
  %v1460 = vmul.f32 %v1452, %v1452
  %v1461 = vmul.f32 %v1453, %v1453
  %v1462 = vmul.f32 %v1454, %v1454
  %v1463 = vmul.f32 %v1455, %v1455
  %v1464 = vmul.f32 %v1456, %v1456
  %v1465 = vadd.f32 %v1457, %v1458
  %v1466 = vadd.f32 %v1465, %v1459
  %v1467 = vadd.f32 %v1466, %v1460
  %1468 = vadd.xlane.f32.xlu0 %v1467
  %v1469 = vpop.xlane.xlu0 %1468
  %v1470 = vadd.f32 %v1461, %v1462
  %v1471 = vadd.f32 %v1470, %v1463
  %v1472 = vadd.f32 %v1471, %v1464
  %1473 = vadd.xlane.f32.xlu0 %v1472
  %v1474 = vpop.xlane.xlu0 %1473
  %v1475 = vmul.f32 %v1469, %v1446
  %v1476 = vmul.f32 %v1474, %v1446
  %v1477 = vadd.f32 %v1475, 1e-05
  %v1478 = vadd.f32 %v1476, 1e-05
  %v1479 = vrsqrt.pop %v1477
  %v1480 = vrsqrt.pop %v1478
  %v1481 = vmul.f32 %v1449, %v1479
  %v1482 = vmul.f32 %v1450, %v1479
  %v1483 = vmul.f32 %v1451, %v1479
  %v1484 = vmul.f32 %v1452, %v1479
  %v1485 = vmul.f32 %v1453, %v1480
  %v1486 = vmul.f32 %v1454, %v1480
  %v1487 = vmul.f32 %v1455, %v1480
  %v1488 = vmul.f32 %v1456, %v1480
  %v1490 = vlaneseq
  %v1491 = vshrl.u32 %v1490, 7
  %v1492 = vsub.s32 0, %v1491
  %v1493 = vrot.slane %v1433, %v1492
  %v1494 = vlaneseq
  %v1495 = vshrl.u32 %v1494, 7
  %v1496 = vsub.s32 1, %v1495
  %v1497 = vrot.slane %v1433, %v1496
  %v1498 = vlaneseq
  %v1499 = vshrl.u32 %v1498, 7
  %v1500 = vsub.s32 2, %v1499
  %v1501 = vrot.slane %v1433, %v1500
  %v1502 = vlaneseq
  %v1503 = vshrl.u32 %v1502, 7
  %v1504 = vsub.s32 3, %v1503
  %v1505 = vrot.slane %v1433, %v1504
  %v1510 = vmul.f32 %v1481, %v1493
  %v1511 = vmul.f32 %v1482, %v1497
  %v1512 = vmul.f32 %v1483, %v1501
  %v1513 = vmul.f32 %v1484, %v1505
  %v1514 = vmul.f32 %v1485, %v1493
  %v1515 = vmul.f32 %v1486, %v1497
  %v1516 = vmul.f32 %v1487, %v1501
  %v1517 = vmul.f32 %v1488, %v1505
  %v1519 = vlaneseq
  %v1520 = vshrl.u32 %v1519, 7
  %v1521 = vsub.s32 0, %v1520
  %v1522 = vrot.slane %v1435, %v1521
  %v1523 = vlaneseq
  %v1524 = vshrl.u32 %v1523, 7
  %v1525 = vsub.s32 1, %v1524
  %v1526 = vrot.slane %v1435, %v1525
  %v1527 = vlaneseq
  %v1528 = vshrl.u32 %v1527, 7
  %v1529 = vsub.s32 2, %v1528
  %v1530 = vrot.slane %v1435, %v1529
  %v1531 = vlaneseq
  %v1532 = vshrl.u32 %v1531, 7
  %v1533 = vsub.s32 3, %v1532
  %v1534 = vrot.slane %v1435, %v1533
  %v1539 = vadd.f32 %v1510, %v1522
  %v1540 = vadd.f32 %v1511, %v1526
  %v1541 = vadd.f32 %v1512, %v1530
  %v1542 = vadd.f32 %v1513, %v1534
  %v1543 = vadd.f32 %v1514, %v1522
  %v1544 = vadd.f32 %v1515, %v1526
  %v1545 = vadd.f32 %v1516, %v1530
  %v1546 = vadd.f32 %v1517, %v1534
  %v1547 = vmax.f32 %v1539, 0.0
  %v1548 = vmax.f32 %v1540, 0.0
  %v1549 = vmax.f32 %v1541, 0.0
  %v1550 = vmax.f32 %v1542, 0.0
  %v1551 = vmax.f32 %v1543, 0.0
  %v1552 = vmax.f32 %v1544, 0.0
  %v1553 = vmax.f32 %v1545, 0.0
  %v1554 = vmax.f32 %v1546, 0.0
  %v1555 = vpack.c.bf16 %v1551, %v1547
  %v1556 = vpack.c.bf16 %v1552, %v1548
  %v1557 = vpack.c.bf16 %v1553, %v1549
  %v1558 = vpack.c.bf16 %v1554, %v1550
  %v1559 = vld [vmem:[%s9] sm:$0xf]
  %v1560 = vld [vmem:[%s9 + $0x4] sm:$0xf]
  %v1561 = vld [vmem:[%s9 + $0x8] sm:$0xf]
  %v1562 = vld [vmem:[%s9 + $0xc] sm:$0xf]
  %v1563 = vld [vmem:[%s9 + $0x10] sm:$0xf]
  %v1564 = vld [vmem:[%s9 + $0x14] sm:$0xf]
  %v1565 = vld [vmem:[%s9 + $0x18] sm:$0xf]
  %v1566 = vld [vmem:[%s9 + $0x1c] sm:$0xf]
  %v1567 = vld [vmem:[%s9 + $0x20] sm:$0xf]
  %v1568 = vld [vmem:[%s9 + $0x24] sm:$0xf]
  %v1569 = vld [vmem:[%s9 + $0x28] sm:$0xf]
  %v1570 = vld [vmem:[%s9 + $0x2c] sm:$0xf]
  %v1571 = vld [vmem:[%s9 + $0x30] sm:$0xf]
  %v1572 = vld [vmem:[%s9 + $0x34] sm:$0xf]
  %v1573 = vld [vmem:[%s9 + $0x38] sm:$0xf]
  %v1574 = vld [vmem:[%s9 + $0x3c] sm:$0xf]
  %v1575 = vld [vmem:[%s9 + $0x40] sm:$0xf]
  %v1576 = vld [vmem:[%s9 + $0x44] sm:$0xf]
  %v1577 = vld [vmem:[%s9 + $0x48] sm:$0xf]
  %v1578 = vld [vmem:[%s9 + $0x4c] sm:$0xf]
  %v1579 = vld [vmem:[%s9 + $0x50] sm:$0xf]
  %v1580 = vld [vmem:[%s9 + $0x54] sm:$0xf]
  %v1581 = vld [vmem:[%s9 + $0x58] sm:$0xf]
  %v1582 = vld [vmem:[%s9 + $0x5c] sm:$0xf]
  %v1583 = vld [vmem:[%s9 + $0x60] sm:$0xf]
  %v1584 = vld [vmem:[%s9 + $0x64] sm:$0xf]
  %v1585 = vld [vmem:[%s9 + $0x68] sm:$0xf]
  %v1586 = vld [vmem:[%s9 + $0x6c] sm:$0xf]
  %v1587 = vld [vmem:[%s9 + $0x70] sm:$0xf]
  %v1588 = vld [vmem:[%s9 + $0x74] sm:$0xf]
  %v1589 = vld [vmem:[%s9 + $0x78] sm:$0xf]
  %v1590 = vld [vmem:[%s9 + $0x7c] sm:$0xf]
  %v1591 = vld [vmem:[%s9 + $0x80] sm:$0xf]
  %v1592 = vld [vmem:[%s9 + $0x84] sm:$0xf]
  %v1593 = vld [vmem:[%s9 + $0x88] sm:$0xf]
  %v1594 = vld [vmem:[%s9 + $0x8c] sm:$0xf]
  %v1595 = vld [vmem:[%s9 + $0x90] sm:$0xf]
  %v1596 = vld [vmem:[%s9 + $0x94] sm:$0xf]
  %v1597 = vld [vmem:[%s9 + $0x98] sm:$0xf]
  %v1598 = vld [vmem:[%s9 + $0x9c] sm:$0xf]
  %v1599 = vld [vmem:[%s9 + $0xa0] sm:$0xf]
  %v1600 = vld [vmem:[%s9 + $0xa4] sm:$0xf]
  %v1601 = vld [vmem:[%s9 + $0xa8] sm:$0xf]
  %v1602 = vld [vmem:[%s9 + $0xac] sm:$0xf]
  %v1603 = vld [vmem:[%s9 + $0xb0] sm:$0xf]
  %v1604 = vld [vmem:[%s9 + $0xb4] sm:$0xf]
  %v1605 = vld [vmem:[%s9 + $0xb8] sm:$0xf]
  %v1606 = vld [vmem:[%s9 + $0xbc] sm:$0xf]
  %v1607 = vld [vmem:[%s9 + $0xc0] sm:$0xf]
  %v1608 = vld [vmem:[%s9 + $0xc4] sm:$0xf]
  %v1609 = vld [vmem:[%s9 + $0xc8] sm:$0xf]
  %v1610 = vld [vmem:[%s9 + $0xcc] sm:$0xf]
  %v1611 = vld [vmem:[%s9 + $0xd0] sm:$0xf]
  %v1612 = vld [vmem:[%s9 + $0xd4] sm:$0xf]
  %v1613 = vld [vmem:[%s9 + $0xd8] sm:$0xf]
  %v1614 = vld [vmem:[%s9 + $0xdc] sm:$0xf]
  %v1615 = vld [vmem:[%s9 + $0xe0] sm:$0xf]
  %v1616 = vld [vmem:[%s9 + $0xe4] sm:$0xf]
  %v1617 = vld [vmem:[%s9 + $0xe8] sm:$0xf]
  %v1618 = vld [vmem:[%s9 + $0xec] sm:$0xf]
  %v1619 = vld [vmem:[%s9 + $0xf0] sm:$0xf]
  %v1620 = vld [vmem:[%s9 + $0xf4] sm:$0xf]
  %v1621 = vld [vmem:[%s9 + $0xf8] sm:$0xf]
  %v1622 = vld [vmem:[%s9 + $0xfc] sm:$0xf]
  %v1623 = vld [vmem:[%s12 + $0x9] sm:$0x1]
  %v1624 = vlaneseq
  %v1625 = vshrl.u32 %v1624, 7
  %v1626 = vsub.s32 0, %v1625
  %v1627 = vrot.slane %v1623, %v1626
  %v1692 = vunpack.c.l.b16 %v1559
  %v1693 = vunpack.c.l.b16 %v1560
  %v1694 = vunpack.c.l.b16 %v1561
  %v1695 = vunpack.c.l.b16 %v1562
  %v1696 = vunpack.c.l.b16 %v1563
  %v1697 = vunpack.c.l.b16 %v1564
  %v1698 = vunpack.c.l.b16 %v1565
  %v1699 = vunpack.c.l.b16 %v1566
  %v1700 = vunpack.c.l.b16 %v1567
  %v1701 = vunpack.c.l.b16 %v1568
  %v1702 = vunpack.c.l.b16 %v1569
  %v1703 = vunpack.c.l.b16 %v1570
  %v1704 = vunpack.c.l.b16 %v1571
  %v1705 = vunpack.c.l.b16 %v1572
  %v1706 = vunpack.c.l.b16 %v1573
  %v1707 = vunpack.c.l.b16 %v1574
  %v1708 = vunpack.c.l.b16 %v1575
  %v1709 = vunpack.c.l.b16 %v1576
  %v1710 = vunpack.c.l.b16 %v1577
  %v1711 = vunpack.c.l.b16 %v1578
  %v1712 = vunpack.c.l.b16 %v1579
  %v1713 = vunpack.c.l.b16 %v1580
  %v1714 = vunpack.c.l.b16 %v1581
  %v1715 = vunpack.c.l.b16 %v1582
  %v1716 = vunpack.c.l.b16 %v1583
  %v1717 = vunpack.c.l.b16 %v1584
  %v1718 = vunpack.c.l.b16 %v1585
  %v1719 = vunpack.c.l.b16 %v1586
  %v1720 = vunpack.c.l.b16 %v1587
  %v1721 = vunpack.c.l.b16 %v1588
  %v1722 = vunpack.c.l.b16 %v1589
  %v1723 = vunpack.c.l.b16 %v1590
  %v1724 = vunpack.c.l.b16 %v1591
  %v1725 = vunpack.c.l.b16 %v1592
  %v1726 = vunpack.c.l.b16 %v1593
  %v1727 = vunpack.c.l.b16 %v1594
  %v1728 = vunpack.c.l.b16 %v1595
  %v1729 = vunpack.c.l.b16 %v1596
  %v1730 = vunpack.c.l.b16 %v1597
  %v1731 = vunpack.c.l.b16 %v1598
  %v1732 = vunpack.c.l.b16 %v1599
  %v1733 = vunpack.c.l.b16 %v1600
  %v1734 = vunpack.c.l.b16 %v1601
  %v1735 = vunpack.c.l.b16 %v1602
  %v1736 = vunpack.c.l.b16 %v1603
  %v1737 = vunpack.c.l.b16 %v1604
  %v1738 = vunpack.c.l.b16 %v1605
  %v1739 = vunpack.c.l.b16 %v1606
  %v1740 = vunpack.c.l.b16 %v1607
  %v1741 = vunpack.c.l.b16 %v1608
  %v1742 = vunpack.c.l.b16 %v1609
  %v1743 = vunpack.c.l.b16 %v1610
  %v1744 = vunpack.c.l.b16 %v1611
  %v1745 = vunpack.c.l.b16 %v1612
  %v1746 = vunpack.c.l.b16 %v1613
  %v1747 = vunpack.c.l.b16 %v1614
  %v1748 = vunpack.c.l.b16 %v1615
  %v1749 = vunpack.c.l.b16 %v1616
  %v1750 = vunpack.c.l.b16 %v1617
  %v1751 = vunpack.c.l.b16 %v1618
  %v1752 = vunpack.c.l.b16 %v1619
  %v1753 = vunpack.c.l.b16 %v1620
  %v1754 = vunpack.c.l.b16 %v1621
  %v1755 = vunpack.c.l.b16 %v1622
  %v1756 = vpack.c.b16 %v1693, %v1692
  %v1757 = vpack.c.b16 %v1695, %v1694
  %v1758 = vpack.c.b16 %v1697, %v1696
  %v1759 = vpack.c.b16 %v1699, %v1698
  %v1760 = vpack.c.b16 %v1701, %v1700
  %v1761 = vpack.c.b16 %v1703, %v1702
  %v1762 = vpack.c.b16 %v1705, %v1704
  %v1763 = vpack.c.b16 %v1707, %v1706
  %v1764 = vpack.c.b16 %v1709, %v1708
  %v1765 = vpack.c.b16 %v1711, %v1710
  %v1766 = vpack.c.b16 %v1713, %v1712
  %v1767 = vpack.c.b16 %v1715, %v1714
  %v1768 = vpack.c.b16 %v1717, %v1716
  %v1769 = vpack.c.b16 %v1719, %v1718
  %v1770 = vpack.c.b16 %v1721, %v1720
  %v1771 = vpack.c.b16 %v1723, %v1722
  %v1772 = vpack.c.b16 %v1725, %v1724
  %v1773 = vpack.c.b16 %v1727, %v1726
  %v1774 = vpack.c.b16 %v1729, %v1728
  %v1775 = vpack.c.b16 %v1731, %v1730
  %v1776 = vpack.c.b16 %v1733, %v1732
  %v1777 = vpack.c.b16 %v1735, %v1734
  %v1778 = vpack.c.b16 %v1737, %v1736
  %v1779 = vpack.c.b16 %v1739, %v1738
  %v1780 = vpack.c.b16 %v1741, %v1740
  %v1781 = vpack.c.b16 %v1743, %v1742
  %v1782 = vpack.c.b16 %v1745, %v1744
  %v1783 = vpack.c.b16 %v1747, %v1746
  %v1784 = vpack.c.b16 %v1749, %v1748
  %v1785 = vpack.c.b16 %v1751, %v1750
  %v1786 = vpack.c.b16 %v1753, %v1752
  %v1787 = vpack.c.b16 %v1755, %v1754
  %1820 = vmatprep.subr.bf16.mxu0 0
  %1821 = vmatpush1.bf16.msra.mxu0 %v1756
  %1822 = vmatprep.subr.bf16.mxu0 0
  %1823 = vmatpush1.bf16.msra.mxu0 %v1757
  %1824 = vmatprep.subr.bf16.mxu0 0
  %1825 = vmatpush1.bf16.msra.mxu0 %v1758
  %1826 = vmatprep.subr.bf16.mxu0 0
  %1827 = vmatpush1.bf16.msra.mxu0 %v1759
  %1828 = vmatprep.subr.bf16.mxu0 0
  %1829 = vmatpush1.bf16.msra.mxu0 %v1760
  %1830 = vmatprep.subr.bf16.mxu0 0
  %1831 = vmatpush1.bf16.msra.mxu0 %v1761
  %1832 = vmatprep.subr.bf16.mxu0 0
  %1833 = vmatpush1.bf16.msra.mxu0 %v1762
  %1834 = vmatprep.subr.bf16.mxu0 0
  %1835 = vmatpush1.bf16.msra.mxu0 %v1763
  %1836 = vmatprep.subr.bf16.mxu0 0
  %1837 = vmatpush1.bf16.msra.mxu0 %v1764
  %1838 = vmatprep.subr.bf16.mxu0 0
  %1839 = vmatpush1.bf16.msra.mxu0 %v1765
  %1840 = vmatprep.subr.bf16.mxu0 0
  %1841 = vmatpush1.bf16.msra.mxu0 %v1766
  %1842 = vmatprep.subr.bf16.mxu0 0
  %1843 = vmatpush1.bf16.msra.mxu0 %v1767
  %1844 = vmatprep.subr.bf16.mxu0 0
  %1845 = vmatpush1.bf16.msra.mxu0 %v1768
  %1846 = vmatprep.subr.bf16.mxu0 0
  %1847 = vmatpush1.bf16.msra.mxu0 %v1769
  %1848 = vmatprep.subr.bf16.mxu0 0
  %1849 = vmatpush1.bf16.msra.mxu0 %v1770
  %1850 = vmatprep.subr.bf16.mxu0 0
  %1851 = vmatpush1.bf16.msra.mxu0 %v1771
  %1852 = vmatprep.mubr.bf16.mxu0 %v1556
  %1853 = vmatmul.mubr.bf16.gmra.mrb[0].mxu0 %v1555
  %v1854 = vpop.f32.mrb[0].mxu0
  %v1855 = vadd.f32 %v1627, %v1854
  %v1856 = vpop.f32.mrb[0].mxu0
  %v1857 = vpop.f32.mrb[0].mxu0
  %v1858 = vadd.f32 %v1627, %v1857
  %v1859 = vpop.f32.mrb[0].mxu0
  %1860 = vdwg.mxu0
  %1861 = vmatprep.subr.bf16.mxu0 0
  %1862 = vmatpush1.bf16.msra.mxu0 %v1772
  %1863 = vmatprep.subr.bf16.mxu0 0
  %1864 = vmatpush1.bf16.msra.mxu0 %v1773
  %1865 = vmatprep.subr.bf16.mxu0 0
  %1866 = vmatpush1.bf16.msra.mxu0 %v1774
  %1867 = vmatprep.subr.bf16.mxu0 0
  %1868 = vmatpush1.bf16.msra.mxu0 %v1775
  %1869 = vmatprep.subr.bf16.mxu0 0
  %1870 = vmatpush1.bf16.msra.mxu0 %v1776
  %1871 = vmatprep.subr.bf16.mxu0 0
  %1872 = vmatpush1.bf16.msra.mxu0 %v1777
  %1873 = vmatprep.subr.bf16.mxu0 0
  %1874 = vmatpush1.bf16.msra.mxu0 %v1778
  %1875 = vmatprep.subr.bf16.mxu0 0
  %1876 = vmatpush1.bf16.msra.mxu0 %v1779
  %1877 = vmatprep.subr.bf16.mxu0 0
  %1878 = vmatpush1.bf16.msra.mxu0 %v1780
  %1879 = vmatprep.subr.bf16.mxu0 0
  %1880 = vmatpush1.bf16.msra.mxu0 %v1781
  %1881 = vmatprep.subr.bf16.mxu0 0
  %1882 = vmatpush1.bf16.msra.mxu0 %v1782
  %1883 = vmatprep.subr.bf16.mxu0 0
  %1884 = vmatpush1.bf16.msra.mxu0 %v1783
  %1885 = vmatprep.subr.bf16.mxu0 0
  %1886 = vmatpush1.bf16.msra.mxu0 %v1784
  %1887 = vmatprep.subr.bf16.mxu0 0
  %1888 = vmatpush1.bf16.msra.mxu0 %v1785
  %1889 = vmatprep.subr.bf16.mxu0 0
  %1890 = vmatpush1.bf16.msra.mxu0 %v1786
  %1891 = vmatprep.subr.bf16.mxu0 0
  %1892 = vmatpush1.bf16.msra.mxu0 %v1787
  %1893 = vmatprep.mubr.bf16.mxu0 %v1558
  %1894 = vmatmul.mubr.bf16.gmra.mrb[0].mxu0 %v1557
  %v1895 = vpop.f32.mrb[0].mxu0
  %v1896 = vadd.f32 %v1855, %v1895
  %v1897 = vpop.f32.mrb[0].mxu0
  %v1898 = vpop.f32.mrb[0].mxu0
  %v1899 = vadd.f32 %v1858, %v1898
  %v1900 = vpop.f32.mrb[0].mxu0
  %1901 = vdwg.mxu0
  %v1902 = vld [vmem:[%s12 + $0xa] sm:$0x1]
  %v1903 = vld [vmem:[%s12 + $0xb] sm:$0x1]
  %1904 = vadd.xlane.f32.xlu0 %v1896
  %v1905 = vpop.xlane.xlu0 %1904
  %1906 = vadd.xlane.f32.xlu0 %v1899
  %v1907 = vpop.xlane.xlu0 %1906
  %v1908 = vrcp.pop 128.0
  %v1909 = vmul.f32 %v1905, %v1908
  %v1910 = vmul.f32 %v1907, %v1908
  %v1911 = vsub.f32 %v1896, %v1909
  %v1912 = vsub.f32 %v1899, %v1910
  %v1913 = vmul.f32 %v1911, %v1911
  %v1914 = vmul.f32 %v1912, %v1912
  %1915 = vadd.xlane.f32.xlu0 %v1913
  %v1916 = vpop.xlane.xlu0 %1915
  %1917 = vadd.xlane.f32.xlu0 %v1914
  %v1918 = vpop.xlane.xlu0 %1917
  %v1919 = vmul.f32 %v1916, %v1908
  %v1920 = vmul.f32 %v1918, %v1908
  %v1921 = vadd.f32 %v1919, 1e-05
  %v1922 = vadd.f32 %v1920, 1e-05
  %v1923 = vrsqrt.pop %v1921
  %v1924 = vrsqrt.pop %v1922
  %v1925 = vmul.f32 %v1911, %v1923
  %v1926 = vmul.f32 %v1912, %v1924
  %v1927 = vlaneseq
  %v1928 = vshrl.u32 %v1927, 7
  %v1929 = vsub.s32 0, %v1928
  %v1930 = vrot.slane %v1902, %v1929
  %v1931 = vmul.f32 %v1925, %v1930
  %v1932 = vmul.f32 %v1926, %v1930
  %v1933 = vlaneseq
  %v1934 = vshrl.u32 %v1933, 7
  %v1935 = vsub.s32 0, %v1934
  %v1936 = vrot.slane %v1903, %v1935
  %v1937 = vadd.f32 %v1931, %v1936
  %v1938 = vadd.f32 %v1932, %v1936
  %v1939 = vpack.c.bf16 %v1938, %v1937
  %v1940 = vld [vmem:[%s10] sm:$0xf]
  %v1941 = vld [vmem:[%s10 + $0x4] sm:$0xf]
  %v1942 = vld [vmem:[%s10 + $0x8] sm:$0xf]
  %v1943 = vld [vmem:[%s10 + $0xc] sm:$0xf]
  %v1944 = vld [vmem:[%s10 + $0x10] sm:$0xf]
  %v1945 = vld [vmem:[%s10 + $0x14] sm:$0xf]
  %v1946 = vld [vmem:[%s10 + $0x18] sm:$0xf]
  %v1947 = vld [vmem:[%s10 + $0x1c] sm:$0xf]
  %v1948 = vld [vmem:[%s10 + $0x20] sm:$0xf]
  %v1949 = vld [vmem:[%s10 + $0x24] sm:$0xf]
  %v1950 = vld [vmem:[%s10 + $0x28] sm:$0xf]
  %v1951 = vld [vmem:[%s10 + $0x2c] sm:$0xf]
  %v1952 = vld [vmem:[%s10 + $0x30] sm:$0xf]
  %v1953 = vld [vmem:[%s10 + $0x34] sm:$0xf]
  %v1954 = vld [vmem:[%s10 + $0x38] sm:$0xf]
  %v1955 = vld [vmem:[%s10 + $0x3c] sm:$0xf]
  %v1956 = vld [vmem:[%s12 + $0xc] sm:$0x1]
  %v1957 = vlaneseq
  %v1958 = vshrl.u32 %v1957, 7
  %v1959 = vsub.s32 0, %v1958
  %v1960 = vrot.slane %v1956, %v1959
  %v1977 = vunpack.c.l.b16 %v1940
  %v1978 = vunpack.c.l.b16 %v1941
  %v1979 = vunpack.c.l.b16 %v1942
  %v1980 = vunpack.c.l.b16 %v1943
  %v1981 = vunpack.c.l.b16 %v1944
  %v1982 = vunpack.c.l.b16 %v1945
  %v1983 = vunpack.c.l.b16 %v1946
  %v1984 = vunpack.c.l.b16 %v1947
  %v1985 = vunpack.c.l.b16 %v1948
  %v1986 = vunpack.c.l.b16 %v1949
  %v1987 = vunpack.c.l.b16 %v1950
  %v1988 = vunpack.c.l.b16 %v1951
  %v1989 = vunpack.c.l.b16 %v1952
  %v1990 = vunpack.c.l.b16 %v1953
  %v1991 = vunpack.c.l.b16 %v1954
  %v1992 = vunpack.c.l.b16 %v1955
  %v1993 = vpack.c.b16 %v1978, %v1977
  %v1994 = vpack.c.b16 %v1980, %v1979
  %v1995 = vpack.c.b16 %v1982, %v1981
  %v1996 = vpack.c.b16 %v1984, %v1983
  %v1997 = vpack.c.b16 %v1986, %v1985
  %v1998 = vpack.c.b16 %v1988, %v1987
  %v1999 = vpack.c.b16 %v1990, %v1989
  %v2000 = vpack.c.b16 %v1992, %v1991
  %2009 = vmatprep.subr.bf16.mxu0 0
  %2010 = vmatpush1.bf16.msra.mxu0 %v1993
  %2011 = vmatprep.subr.bf16.mxu0 0
  %2012 = vmatpush1.bf16.msra.mxu0 %v1994
  %2013 = vmatprep.subr.bf16.mxu0 0
  %2014 = vmatpush1.bf16.msra.mxu0 %v1995
  %2015 = vmatprep.subr.bf16.mxu0 0
  %2016 = vmatpush1.bf16.msra.mxu0 %v1996
  %2017 = vmatprep.subr.bf16.mxu0 0
  %2018 = vmatpush1.bf16.msra.mxu0 %v1997
  %2019 = vmatprep.subr.bf16.mxu0 0
  %2020 = vmatpush1.bf16.msra.mxu0 %v1998
  %2021 = vmatprep.subr.bf16.mxu0 0
  %2022 = vmatpush1.bf16.msra.mxu0 %v1999
  %2023 = vmatprep.subr.bf16.mxu0 0
  %2024 = vmatpush1.bf16.msra.mxu0 %v2000
  %2025 = vmatprep.subr.bf16.mxu0 0
  %2026 = vmatpush1.bf16.msra.mxu0 0
  %2027 = vmatprep.subr.bf16.mxu0 0
  %2028 = vmatpush1.bf16.msra.mxu0 0
  %2029 = vmatprep.subr.bf16.mxu0 0
  %2030 = vmatpush1.bf16.msra.mxu0 0
  %2031 = vmatprep.subr.bf16.mxu0 0
  %2032 = vmatpush1.bf16.msra.mxu0 0
  %2033 = vmatprep.subr.bf16.mxu0 0
  %2034 = vmatpush1.bf16.msra.mxu0 0
  %2035 = vmatprep.subr.bf16.mxu0 0
  %2036 = vmatpush1.bf16.msra.mxu0 0
  %2037 = vmatprep.subr.bf16.mxu0 0
  %2038 = vmatpush1.bf16.msra.mxu0 0
  %2039 = vmatprep.subr.bf16.mxu0 0
  %2040 = vmatpush1.bf16.msra.mxu0 0
  %2041 = vmatprep.mubr.bf16.mxu0 0
  %2042 = vmatmul.mubr.bf16.gmra.mrb[0].mxu0 %v1939
  %v2043 = vpop.f32.mrb[0].mxu0
  %v2044 = vadd.f32 %v1960, %v2043
  %v2045 = vpop.f32.mrb[0].mxu0
  %v2046 = vpop.f32.mrb[0].mxu0
  %v2047 = vadd.f32 %v1960, %v2046
  %v2048 = vpop.f32.mrb[0].mxu0
  %2049 = vdwg.mxu0
  %v2050 = vmax.f32 %v2044, 0.0
  %v2051 = vmax.f32 %v2047, 0.0
  %v2052 = vpack.c.bf16 %v2051, %v2050
  %v2053 = vld [vmem:[%s11] sm:$0xf]
  %v2054 = vld [vmem:[%s12 + $0xd] sm:$0x1]
  %v2055 = vlaneseq
  %v2056 = vshrl.u32 %v2055, 7
  %v2057 = vsub.s32 0, %v2056
  %v2058 = vrot.slane %v2054, %v2057
  %v2060 = vsel %vm472, %v2052, 0
  %vm2062 = vcmask 1043456
  %v2064 = vsel %vm2062, %v2053, 0
  %2066 = vmatprep.subr.bf16.mxu0 0
  %2067 = vmatpush1.bf16.msra.mxu0 %v2064
  %2068 = vmatprep.subr.bf16.mxu0 0
  %2069 = vmatpush1.bf16.msra.mxu0 0
  %2070 = vmatprep.subr.bf16.mxu0 0
  %2071 = vmatpush1.bf16.msra.mxu0 0
  %2072 = vmatprep.subr.bf16.mxu0 0
  %2073 = vmatpush1.bf16.msra.mxu0 0
  %2074 = vmatprep.subr.bf16.mxu0 0
  %2075 = vmatpush1.bf16.msra.mxu0 0
  %2076 = vmatprep.subr.bf16.mxu0 0
  %2077 = vmatpush1.bf16.msra.mxu0 0
  %2078 = vmatprep.subr.bf16.mxu0 0
  %2079 = vmatpush1.bf16.msra.mxu0 0
  %2080 = vmatprep.subr.bf16.mxu0 0
  %2081 = vmatpush1.bf16.msra.mxu0 0
  %2082 = vmatprep.subr.bf16.mxu0 0
  %2083 = vmatpush1.bf16.msra.mxu0 0
  %2084 = vmatprep.subr.bf16.mxu0 0
  %2085 = vmatpush1.bf16.msra.mxu0 0
  %2086 = vmatprep.subr.bf16.mxu0 0
  %2087 = vmatpush1.bf16.msra.mxu0 0
  %2088 = vmatprep.subr.bf16.mxu0 0
  %2089 = vmatpush1.bf16.msra.mxu0 0
  %2090 = vmatprep.subr.bf16.mxu0 0
  %2091 = vmatpush1.bf16.msra.mxu0 0
  %2092 = vmatprep.subr.bf16.mxu0 0
  %2093 = vmatpush1.bf16.msra.mxu0 0
  %2094 = vmatprep.subr.bf16.mxu0 0
  %2095 = vmatpush1.bf16.msra.mxu0 0
  %2096 = vmatprep.subr.bf16.mxu0 0
  %2097 = vmatpush1.bf16.msra.mxu0 0
  %2098 = vmatprep.mubr.bf16.mxu0 0
  %2099 = vmatmul.mubr.bf16.gmra.mrb[0].mxu0 %v2060
  %v2100 = vpop.f32.mrb[0].mxu0
  %v2101 = vadd.f32 %v2058, %v2100
  %v2102 = vpop.f32.mrb[0].mxu0
  %v2103 = vpop.f32.mrb[0].mxu0
  %v2104 = vadd.f32 %v2058, %v2103
  %v2105 = vpop.f32.mrb[0].mxu0
  %2106 = vdwg.mxu0
  %2107 = vst [vmem:[%s14] sm:$0xff] %v2101
  %2108 = vst [vmem:[%s14 + $0x8] sm:$0xff] %v2104
  // Predicated region
  $region58: #{graph_masked_lm_forward.1} parent=0 // pred_check
    _
  $region59: #{graph_masked_lm_forward.1} parent=0 // pred_check_branch
    %2110 = sbr.rel (0) target = $region61
  $region60: #{graph_masked_lm_forward.1} parent=0 // pred_region
    _
  $region61: #{graph_masked_lm_forward.1} parent=0 // pred_fallthru
    _
  // Predicated region
  $region62: #{graph_masked_lm_forward.1} parent=0 // pred_check
    _
  $region63: #{graph_masked_lm_forward.1} parent=0 // pred_check_branch
    %2112 = sbr.rel (0) target = $region65
  $region64: #{graph_masked_lm_forward.1} parent=0 // pred_region
    _
  $region65: #{graph_masked_lm_forward.1} parent=0 // pred_fallthru
    _

</llo_original>
